<compile_context>
chip_gen: v7x
topology: tpu7x:2x2x1
jax: 0.10.0
libtpu: 0.0.40
codegen_flags: <defaults>
</compile_context>

<pallas_src>
import math

import jax
import jax.numpy as jnp
from jax import lax
from jax.experimental import pallas as pl
from jax.experimental.pallas import tpu as pltpu


def _pick_block_rows(h_out, w_out, target_rows=512):
    """Output rows per grid step.

    Take the whole image if it is small; otherwise the largest divisor of
    h_out whose band gives a lane-aligned matmul M dim (TH*w_out % 128 == 0)
    with TH*w_out <= target_rows.  Falls back to the whole image (full-dim
    blocks are always legal).
    """
    cap = max(1, target_rows // max(w_out, 1))
    if cap >= h_out:
        return h_out
    for th in range(cap, 0, -1):
        if h_out % th == 0 and (th * w_out) % 128 == 0:
            return th
    return h_out


def conv_layer_pallas(x_nchw, w_oihw, bias, stride=1):
    """Forward of ConvLayer: reflection-pad by K//2, then Conv2d(K, stride)."""
    B, Cin, H, W = x_nchw.shape
    Cout, Cin_w, K, K2 = w_oihw.shape
    assert Cin_w == Cin and K == K2
    pad = K // 2

    # Reflection pad the spatial dims (module semantics).  Stays NCHW.
    xp = jnp.pad(x_nchw, ((0, 0), (0, 0), (pad, pad), (pad, pad)),
                 mode="reflect")
    Hp, Wp = H + 2 * pad, W + 2 * pad
    Hout = (Hp - K) // stride + 1
    Wout = (Wp - K) // stride + 1

    # (Cout, Cin, K, K) -> (Cout, K, K, Cin) -> (Cout, K*K*Cin).  Column order
    # (kh-major, then kw, then cin) matches the tap concatenation order used
    # inside the kernel.
    w = jnp.transpose(w_oihw, (0, 2, 3, 1)).reshape(Cout, K * K * Cin)
    w = w.astype(x_nchw.dtype)
    b2 = bias.reshape(Cout, 1).astype(jnp.float32)

    TH = _pick_block_rows(Hout, Wout)             # output rows per grid step
    nH = Hout // TH
    BH = (TH - 1) * stride + K                    # input rows needed per band

    def kernel(x_ref, w_ref, b_ref, o_ref):
        if nH == 1:
            band = x_ref[0]                                   # (Cin, Hp, Wp)
        else:
            i = pl.program_id(1)
            r0 = pl.multiple_of(i * (TH * stride), TH * stride)
            band = x_ref[0, :, pl.ds(r0, BH), :]              # (Cin, BH, Wp)

        taps = []
        for kh in range(K):
            for kw in range(K):
                if stride == 1:
                    patch = band[:, kh:kh + TH, kw:kw + Wout]
                else:
                    patch = lax.slice(
                        band,
                        (0, kh, kw),
                        (Cin,
                         kh + (TH - 1) * stride + 1,
                         kw + (Wout - 1) * stride + 1),
                        (1, stride, stride))
                taps.append(patch.reshape(Cin, TH * Wout))
        # (K*K*Cin, TH*Wout): contraction on sublanes, spatial on lanes.
        patches = jnp.concatenate(taps, axis=0)

        # One deep MXU matmul, f32 accumulation, then bias.
        y = jnp.dot(w_ref[...], patches, preferred_element_type=jnp.float32)
        y = y + b_ref[...]
        o_ref[0] = y.astype(o_ref.dtype)                      # (Cout, TH*Wout)

    out = pl.pallas_call(
        kernel,
        out_shape=jax.ShapeDtypeStruct((B, Cout, Hout * Wout), x_nchw.dtype),
        grid=(B, nH),
        in_specs=[
            pl.BlockSpec((1, Cin, Hp, Wp), lambda b, i: (b, 0, 0, 0)),
            pl.BlockSpec((Cout, K * K * Cin), lambda b, i: (0, 0)),
            pl.BlockSpec((Cout, 1), lambda b, i: (0, 0)),
        ],
        out_specs=pl.BlockSpec((1, Cout, TH * Wout), lambda b, i: (b, 0, i)),
        compiler_params=pltpu.CompilerParams(
            dimension_semantics=("parallel", "parallel")),
    )(xp, w, b2)

    # Row-major reshape back to the NCHW image layout (no data movement).
    return out.reshape(B, Cout, Hout, Wout)


# ----------------------------------------------------------------------------
# Plain-JAX reference (same math, lax conv) for correctness checking.
# ----------------------------------------------------------------------------
def conv_layer_ref(x_nchw, w_oihw, bias, stride=1):
    K = w_oihw.shape[-1]
    pad = K // 2
    xpad = jnp.pad(x_nchw, ((0, 0), (0, 0), (pad, pad), (pad, pad)),
                   mode="reflect")
    y = lax.conv_general_dilated(
        xpad, w_oihw, (stride, stride), "VALID",
        dimension_numbers=("NCHW", "OIHW", "NCHW"),
        preferred_element_type=jnp.float32)
    return y + bias.astype(jnp.float32)[None, :, None, None]


if __name__ == "__main__":
    key = jax.random.PRNGKey(0)
    kx, kw3, kw5, kb = jax.random.split(key, 4)

    B, Cin, H, W = 2, 4, 16, 16
    Cout = 8
    x = jax.random.normal(kx, (B, Cin, H, W), jnp.float32)
    bias = 0.1 * jax.random.normal(kb, (Cout,), jnp.float32)

    # --- 3x3, stride 1, float32 --------------------------------------------
    K = 3
    w3 = jax.random.normal(kw3, (Cout, Cin, K, K), jnp.float32) / math.sqrt(K * K * Cin)
    out = jax.block_until_ready(conv_layer_pallas(x, w3, bias, stride=1))
    ref = jax.block_until_ready(conv_layer_ref(x, w3, bias, stride=1))
    assert out.shape == (B, Cout, H, W), out.shape
    err = float(jnp.max(jnp.abs(out.astype(jnp.float32) - ref)))
    if err > 1e-4:
        raise AssertionError(f"3x3 f32 mismatch: max abs err = {err}")

    # --- 5x5, stride 1, float32 --------------------------------------------
    K = 5
    w5 = jax.random.normal(kw5, (Cout, Cin, K, K), jnp.float32) / math.sqrt(K * K * Cin)
    out5 = jax.block_until_ready(conv_layer_pallas(x, w5, bias, stride=1))
    ref5 = jax.block_until_ready(conv_layer_ref(x, w5, bias, stride=1))
    assert out5.shape == (B, Cout, H, W), out5.shape
    err5 = float(jnp.max(jnp.abs(out5.astype(jnp.float32) - ref5)))
    if err5 > 1e-4:
        raise AssertionError(f"5x5 f32 mismatch: max abs err = {err5}")

    # --- 3x3, stride 1, bfloat16 activations/weights (f32 accumulation) -----
    xb = x.astype(jnp.bfloat16)
    wb = w3.astype(jnp.bfloat16)
    outb = jax.block_until_ready(conv_layer_pallas(xb, wb, bias, stride=1))
    refb = jax.block_until_ready(conv_layer_ref(xb, wb, bias, stride=1))
    assert outb.dtype == jnp.bfloat16 and outb.shape == (B, Cout, H, W)
    errb = float(jnp.max(jnp.abs(outb.astype(jnp.float32) - refb)))
    if errb > 5e-2:
        raise AssertionError(f"3x3 bf16 mismatch: max abs err = {errb}")

    print("KERNEL_OK")
</pallas_src>

<mosaic_0001>
module attributes {stable_mosaic.version = 11 : i64} {
  func.func @kernel(%arg0: i32, %arg1: i32, %arg2: memref<1x4x18x18xf32, #tpu.memory_space<vmem>>, %arg3: memref<8x36xf32, #tpu.memory_space<vmem>>, %arg4: memref<8x1xf32, #tpu.memory_space<vmem>>, %arg5: memref<1x8x256xf32, #tpu.memory_space<vmem>>) attributes {dimension_semantics = [#tpu.dimension_semantics<parallel>, #tpu.dimension_semantics<parallel>], iteration_bounds = array<i64: 2, 1>, scalar_prefetch = 0 : i64, scratch_operands = 0 : i64, tpu.core_type = #tpu.core_type<tc>, window_params = [{transform_indices = @transform_0, window_bounds = array<i64: 1, 4, 18, 18>}, {pipeline_mode = #tpu.pipeline_mode<synchronous>, transform_indices = @transform_1, window_bounds = array<i64: 8, 36>}, {pipeline_mode = #tpu.pipeline_mode<synchronous>, transform_indices = @transform_2, window_bounds = array<i64: 8, 1>}, {transform_indices = @transform_3, window_bounds = array<i64: 1, 8, 256>}]} {
    %c0 = arith.constant 0 : index
    %c0_0 = arith.constant 0 : index
    %c0_1 = arith.constant 0 : index
    %c0_2 = arith.constant 0 : index
    %0 = vector.load %arg2[%c0, %c0_0, %c0_1, %c0_2] : memref<1x4x18x18xf32, #tpu.memory_space<vmem>>, vector<1x4x18x18xf32>
    %1 = vector.shape_cast %0 : vector<1x4x18x18xf32> to vector<4x18x18xf32>
    %2 = vector.extract_strided_slice %1 {offsets = [0, 0, 0], sizes = [4, 16, 16], strides = [1, 1, 1]} : vector<4x18x18xf32> to vector<4x16x16xf32>
    %3 = vector.shape_cast %2 : vector<4x16x16xf32> to vector<4x256xf32>
    %4 = vector.extract_strided_slice %1 {offsets = [0, 0, 1], sizes = [4, 16, 16], strides = [1, 1, 1]} : vector<4x18x18xf32> to vector<4x16x16xf32>
    %5 = vector.shape_cast %4 : vector<4x16x16xf32> to vector<4x256xf32>
    %6 = vector.extract_strided_slice %1 {offsets = [0, 0, 2], sizes = [4, 16, 16], strides = [1, 1, 1]} : vector<4x18x18xf32> to vector<4x16x16xf32>
    %7 = vector.shape_cast %6 : vector<4x16x16xf32> to vector<4x256xf32>
    %8 = vector.extract_strided_slice %1 {offsets = [0, 1, 0], sizes = [4, 16, 16], strides = [1, 1, 1]} : vector<4x18x18xf32> to vector<4x16x16xf32>
    %9 = vector.shape_cast %8 : vector<4x16x16xf32> to vector<4x256xf32>
    %10 = vector.extract_strided_slice %1 {offsets = [0, 1, 1], sizes = [4, 16, 16], strides = [1, 1, 1]} : vector<4x18x18xf32> to vector<4x16x16xf32>
    %11 = vector.shape_cast %10 : vector<4x16x16xf32> to vector<4x256xf32>
    %12 = vector.extract_strided_slice %1 {offsets = [0, 1, 2], sizes = [4, 16, 16], strides = [1, 1, 1]} : vector<4x18x18xf32> to vector<4x16x16xf32>
    %13 = vector.shape_cast %12 : vector<4x16x16xf32> to vector<4x256xf32>
    %14 = vector.extract_strided_slice %1 {offsets = [0, 2, 0], sizes = [4, 16, 16], strides = [1, 1, 1]} : vector<4x18x18xf32> to vector<4x16x16xf32>
    %15 = vector.shape_cast %14 : vector<4x16x16xf32> to vector<4x256xf32>
    %16 = vector.extract_strided_slice %1 {offsets = [0, 2, 1], sizes = [4, 16, 16], strides = [1, 1, 1]} : vector<4x18x18xf32> to vector<4x16x16xf32>
    %17 = vector.shape_cast %16 : vector<4x16x16xf32> to vector<4x256xf32>
    %18 = vector.extract_strided_slice %1 {offsets = [0, 2, 2], sizes = [4, 16, 16], strides = [1, 1, 1]} : vector<4x18x18xf32> to vector<4x16x16xf32>
    %19 = vector.shape_cast %18 : vector<4x16x16xf32> to vector<4x256xf32>
    %20 = tpu.concatenate %3, %5, %7, %9, %11, %13, %15, %17, %19 in 0 : vector<4x256xf32>, vector<4x256xf32>, vector<4x256xf32>, vector<4x256xf32>, vector<4x256xf32>, vector<4x256xf32>, vector<4x256xf32>, vector<4x256xf32>, vector<4x256xf32> -> vector<36x256xf32>
    %c0_3 = arith.constant 0 : index
    %c0_4 = arith.constant 0 : index
    %21 = vector.load %arg3[%c0_3, %c0_4] : memref<8x36xf32, #tpu.memory_space<vmem>>, vector<8x36xf32>
    %cst = arith.constant dense<0.000000e+00> : vector<8x256xf32>
    %22 = tpu.matmul %21, %20, %cst {dimension_numbers = #tpu.dot_dimension_numbers<[1], [0], [0], [1], [0, 0, 1, 1], [], []>} : vector<8x36xf32>, vector<36x256xf32>, vector<8x256xf32> -> vector<8x256xf32>
    %c0_5 = arith.constant 0 : index
    %c0_6 = arith.constant 0 : index
    %23 = vector.load %arg4[%c0_5, %c0_6] : memref<8x1xf32, #tpu.memory_space<vmem>>, vector<8x1xf32>
    %24 = vector.broadcast %23 : vector<8x1xf32> to vector<8x256xf32>
    %25 = arith.addf %22, %24 : vector<8x256xf32>
    %c0_7 = arith.constant 0 : index
    %c0_8 = arith.constant 0 : index
    %c0_9 = arith.constant 0 : index
    %26 = vector.load %arg5[%c0_7, %c0_8, %c0_9] : memref<1x8x256xf32, #tpu.memory_space<vmem>>, vector<1x8x256xf32>
    %27 = vector.shape_cast %26 : vector<1x8x256xf32> to vector<8x256xf32>
    %28 = vector.shape_cast %25 : vector<8x256xf32> to vector<1x8x256xf32>
    tpu.vector_store %arg5[%c0_7, %c0_8, %c0_9], %28 {strides = array<i32>} : memref<1x8x256xf32, #tpu.memory_space<vmem>>, vector<1x8x256xf32>,
    return
  }
  func.func @transform_0(%arg0: i32, %arg1: i32) -> (i32, i32, i32, i32) {
    %c0_i32 = arith.constant 0 : i32
    %c0_i32_0 = arith.constant 0 : i32
    %c0_i32_1 = arith.constant 0 : i32
    %c0_i32_2 = arith.constant 0 : i32
    return %arg0, %c0_i32, %c0_i32_0, %c0_i32_1 : i32, i32, i32, i32
  }
  func.func @transform_1(%arg0: i32, %arg1: i32) -> (i32, i32) {
    %c0_i32 = arith.constant 0 : i32
    %c0_i32_0 = arith.constant 0 : i32
    %c0_i32_1 = arith.constant 0 : i32
    return %c0_i32, %c0_i32_0 : i32, i32
  }
  func.func @transform_2(%arg0: i32, %arg1: i32) -> (i32, i32) {
    %c0_i32 = arith.constant 0 : i32
    %c0_i32_0 = arith.constant 0 : i32
    %c0_i32_1 = arith.constant 0 : i32
    return %c0_i32, %c0_i32_0 : i32, i32
  }
  func.func @transform_3(%arg0: i32, %arg1: i32) -> (i32, i32, i32) {
    %c0_i32 = arith.constant 0 : i32
    %c0_i32_0 = arith.constant 0 : i32
    return %arg0, %c0_i32, %arg1 : i32, i32, i32
  }
}

</mosaic_0001>

<llo_original>
// kernel: tpu_custom_call.1
$region0: #{tpu_custom_call.1}
  #allocation0 [shape = 'u32[]', space=smem, size = 0x4, offset = 0x4, fixed_abs, tag = 'smem constant byte address 0x4 - core index']
  #allocation1 [shape = 'u32[144,128]{1,0:T(1,128)}', space=vmem, size = 0x12000, scoped, tag = 'internal scratch']
  %s0 = inlined_call_operand.vmem [shape: f32[2,4,18,18], index: 0, kind: input, shape index: {}]
  %s1 = inlined_call_operand.vmem [shape: f32[8,36], index: 1, kind: input, shape index: {}]
  %s2 = inlined_call_operand.vmem [shape: f32[8,1], index: 2, kind: input, shape index: {}]
  %s3 = inlined_call_operand.hbm [shape: f32[2,8,256], index: 3, kind: output, shape index: {}]
  %s4 = sld [smem:[#allocation0]]
  $region45: #{tpu_custom_call.1} parent=0
    _
  %s6 = ssub.s32 1, %s4
  %s7 = scalar_select 0, %s6, %s4
  $region1: #{tpu_custom_call.1} parent=0
    #allocation2 [shape = 'u8[16384]{0}', space=vmem, size = 0x4000, scoped, tag = 'output window, operand 0']
    #allocation3 [shape = 's32[2]{0}', space=sflag, size = 0x8, scoped, tag = 'scoped memory for tpu_custom_call.1']
    %8 = vsyncpa [#allocation3], 0
    %s9 = scalar_lea.sflag [#allocation3], 1
    %10 = vsyncpa %s9, 0
    loop: start=0, step=1, limit=4
    $region2: #{tpu_custom_call.1} parent=1 // loop_pre_header
      _
    $region3: #{tpu_custom_call.1} parent=1 // loop_header
      %s12 = sphi 0, %s16
      %p13 = scmp.ge.s32.totalorder %s12, 4
      %s19 = sphi 0, %s31
      %s20 = sphi 0, %s27
      %s21 = sphi 0, %s19
      %s22 = sphi 0, %s20
      %s23 = sphi 0, %s21
      %s24 = sphi 0, %s22
      %s34 = sphi 0, %s36
      %s37 = sphi 0, %s34
      %s38 = sphi 0, %s37
      %s54 = sphi 0, %s38
      %s58 = sphi 0, %s58
      %s60 = sphi 0, %s58
      %s61 = sphi 0, %s60
      %s75 = sphi 0, %s61
      %s79 = sphi 0, %s79
      %s81 = sphi 0, %s79
      %s82 = sphi 0, %s81
      %s96 = sphi 0, %s82
      %s104 = sphi 0, %s106
      %s107 = sphi 0, %s104
      %s108 = sphi 0, %s107
      %s124 = sphi 0, %s108
    $region4: #{tpu_custom_call.1} parent=1 // loop_header_branch
      %15 = sbr.rel (%p13) target = $region8
    $region5: #{tpu_custom_call.1} parent=1 // loop_body
      %s17 = ssub.s32 %s12, 1
      %s18 = ssub.s32 %s12, 2
      %s25 = sadd.s32 1, %s20
      %p26 = scmp.ge.s32.totalorder %s25, 1
      %s27 = scalar_select %p26, 0, %s25
      %s28 = sadd.s32 1, %s19
      %s29 = scalar_select %p26, %s28, %s19
      %p30 = scmp.ge.s32.totalorder %s29, 2
      %s31 = scalar_select %p30, 0, %s29
      %s32 = ssub.s32 %s19, %s31
      %p33 = scmp.eq.s32.totalorder %s32, 0
      %s35 = sadd.s32 %s34, 1
      %s36 = scalar_select %p33, %s34, %s35
      %p39 = pneg %p33
      %p40 = scmp.eq.s32.totalorder %s12, 1
      %p41 = por %p39, %p40
      %p42 = scmp.ne.s32.totalorder %s34, %s37
      %p43 = scmp.eq.s32.totalorder %s12, 0
      %p44 = por %p42, %p43
      %p45 = scmp.ne.s32.totalorder %s34, %s37
      %p46 = scmp.eq.s32.totalorder %s17, 1
      %p47 = por %p45, %p46
      %p48 = scmp.ne.s32.totalorder %s37, %s38
      %p49 = scmp.eq.s32.totalorder %s17, 0
      %p50 = por %p48, %p49
      %p51 = scmp.ne.s32.totalorder %s37, %s38
      %p52 = scmp.eq.s32.totalorder %s18, 1
      %p53 = por %p51, %p52
      %p55 = scmp.ne.s32.totalorder %s38, %s54
      %p56 = scmp.eq.s32.totalorder %s18, 0
      %p57 = por %p55, %p56
      %s59 = sadd.s32 %s58, 1
      %p62 = scmp.eq.s32.totalorder %s12, 1
      %p63 = scmp.ne.s32.totalorder %s58, %s60
      %p64 = scmp.eq.s32.totalorder %s12, 0
      %p65 = por %p63, %p64
      %p66 = scmp.ne.s32.totalorder %s58, %s60
      %p67 = scmp.eq.s32.totalorder %s17, 1
      %p68 = por %p66, %p67
      %p69 = scmp.ne.s32.totalorder %s60, %s61
      %p70 = scmp.eq.s32.totalorder %s17, 0
      %p71 = por %p69, %p70
      %p72 = scmp.ne.s32.totalorder %s60, %s61
      %p73 = scmp.eq.s32.totalorder %s18, 1
      %p74 = por %p72, %p73
      %p76 = scmp.ne.s32.totalorder %s61, %s75
      %p77 = scmp.eq.s32.totalorder %s18, 0
      %p78 = por %p76, %p77
      %s80 = sadd.s32 %s79, 1
      %p83 = scmp.eq.s32.totalorder %s12, 1
      %p84 = scmp.ne.s32.totalorder %s79, %s81
      %p85 = scmp.eq.s32.totalorder %s12, 0
      %p86 = por %p84, %p85
      %p87 = scmp.ne.s32.totalorder %s79, %s81
      %p88 = scmp.eq.s32.totalorder %s17, 1
      %p89 = por %p87, %p88
      %p90 = scmp.ne.s32.totalorder %s81, %s82
      %p91 = scmp.eq.s32.totalorder %s17, 0
      %p92 = por %p90, %p91
      %p93 = scmp.ne.s32.totalorder %s81, %s82
      %p94 = scmp.eq.s32.totalorder %s18, 1
      %p95 = por %p93, %p94
      %p97 = scmp.ne.s32.totalorder %s82, %s96
      %p98 = scmp.eq.s32.totalorder %s18, 0
      %p99 = por %p97, %p98
      %s100 = ssub.s32 %s19, %s31
      %s101 = ssub.s32 %s20, %s27
      %s102 = sor.u32 %s100, %s101
      %p103 = scmp.eq.s32.totalorder %s102, 0
      %s105 = sadd.s32 %s104, 1
      %s106 = scalar_select %p103, %s104, %s105
      %p109 = pneg %p103
      %p110 = scmp.eq.s32.totalorder %s12, 1
      %p111 = por %p109, %p110
      %p112 = scmp.ne.s32.totalorder %s104, %s107
      %p113 = scmp.eq.s32.totalorder %s12, 0
      %p114 = por %p112, %p113
      %p115 = scmp.ne.s32.totalorder %s104, %s107
      %p116 = scmp.eq.s32.totalorder %s17, 1
      %p117 = por %p115, %p116
      %p118 = scmp.ne.s32.totalorder %s107, %s108
      %p119 = scmp.eq.s32.totalorder %s17, 0
      %p120 = por %p118, %p119
      %p121 = scmp.ne.s32.totalorder %s107, %s108
      %p122 = scmp.eq.s32.totalorder %s18, 1
      %p123 = por %p121, %p122
      %p125 = scmp.ne.s32.totalorder %s108, %s124
      %p126 = scmp.eq.s32.totalorder %s18, 0
      %p127 = por %p125, %p126
      %p128 = scmp.le.s32.totalorder 1, %s12
      %p129 = scmp.lt.s32.totalorder %s12, 3
      %p130 = pnand %p128, %p129
      %p131 = pneg %p130
      // Predicated region
      $region9: #{tpu_custom_call.1} parent=5 // pred_check
        _
      $region10: #{tpu_custom_call.1} parent=5 // pred_check_branch
        %133 = sbr.rel (%p130) target = $region12
      $region11: #{tpu_custom_call.1} parent=5 // pred_region
        %s134 = ssub.s32 %s12, 1
        // Predicated region
        $region13: #{tpu_custom_call.1} parent=11 // pred_check
          %p135 = pneg %p71
        $region14: #{tpu_custom_call.1} parent=11 // pred_check_branch
          %137 = sbr.rel (%p135) target = $region16
        $region15: #{tpu_custom_call.1} parent=11 // pred_region
          _
        $region16: #{tpu_custom_call.1} parent=11 // pred_fallthru
          _
        // Predicated region
        $region17: #{tpu_custom_call.1} parent=11 // pred_check
          %p138 = pneg %p92
        $region18: #{tpu_custom_call.1} parent=11 // pred_check_branch
          %140 = sbr.rel (%p138) target = $region20
        $region19: #{tpu_custom_call.1} parent=11 // pred_region
          _
        $region20: #{tpu_custom_call.1} parent=11 // pred_fallthru
          _
      $region12: #{tpu_custom_call.1} parent=5 // pred_fallthru
        _
      %p141 = scmp.lt.s32.totalorder %s12, 2
      // Predicated region
      $region21: #{tpu_custom_call.1} parent=5 // pred_check
        %p142 = pneg %p141
      $region22: #{tpu_custom_call.1} parent=5 // pred_check_branch
        %144 = sbr.rel (%p142) target = $region24
      $region23: #{tpu_custom_call.1} parent=5 // pred_region
        // Predicated region
        $region25: #{tpu_custom_call.1} parent=23 // pred_check
          %p145 = pneg %p44
        $region26: #{tpu_custom_call.1} parent=23 // pred_check_branch
          %147 = sbr.rel (%p145) target = $region28
        $region27: #{tpu_custom_call.1} parent=23 // pred_region
          %p148 = scmp.lt.s32.totalorder %s19, 1
          %s149 = scalar_select %p148, %s19, 1
          %s150 = smul.addr %s149, 12
          %s151 = smul.addr %s150, 8
          %s152 = scalar_lea.vmem %s0, %s151
        $region28: #{tpu_custom_call.1} parent=23 // pred_fallthru
          _
      $region24: #{tpu_custom_call.1} parent=5 // pred_fallthru
        _
      %p153 = scmp.le.s32.totalorder 1, %s12
      %p154 = scmp.lt.s32.totalorder %s12, 3
      %p155 = pnand %p153, %p154
      %p156 = pneg %p155
      // Predicated region
      $region29: #{tpu_custom_call.1} parent=5 // pred_check
        _
      $region30: #{tpu_custom_call.1} parent=5 // pred_check_branch
        %158 = sbr.rel (%p155) target = $region32
      $region31: #{tpu_custom_call.1} parent=5 // pred_region
        %s159 = ssub.s32 %s12, 1
        %p160 = scmp.lt.s32.totalorder %s21, 1
        %s161 = scalar_select %p160, %s21, 1
        %s162 = smul.addr %s161, 12
        %s163 = smul.addr %s162, 8
        %s164 = scalar_lea.vmem %s0, %s163
        %p165 = pneg %p50
        %p166 = pneg %p47
        %p167 = pneg %p71
        %p168 = pneg %p68
        %p169 = pneg %p92
        %p170 = pneg %p89
        %p171 = pneg %p120
        %p172 = pneg %p117
        %s173 = sand.u32 %s107, 1
        %s174 = scalar_lea.sflag [#allocation3], %s173
        %s175 = sand.u32 %s107, 1
        %s176 = smul.addr %s175, 16
        %s177 = scalar_lea.vmem [#allocation2], %s176
        %p178 = scmp.lt.s32.totalorder %s21, 1
        %s179 = scalar_select %p178, %s21, 1
        %s180 = smul.addr %s179, 12
        %s181 = smul.addr %s180, 8
        %s182 = scalar_lea.vmem %s0, %s181
        %s183 = smul.u32 2, %s22
        %v184 = vld [vmem:[%s182] sm:$0xff]
        %v185 = vld [vmem:[%s182 + $0x8] sm:$0xff]
        %v186 = vld [vmem:[%s182 + $0x10] sm:$0x3]
        %v187 = vld [vmem:[%s182 + $0x18] sm:$0xff]
        %v188 = vld [vmem:[%s182 + $0x20] sm:$0xff]
        %v189 = vld [vmem:[%s182 + $0x28] sm:$0x3]
        %v190 = vld [vmem:[%s182 + $0x30] sm:$0xff]
        %v191 = vld [vmem:[%s182 + $0x38] sm:$0xff]
        %v192 = vld [vmem:[%s182 + $0x40] sm:$0x3]
        %v193 = vld [vmem:[%s182 + $0x48] sm:$0xff]
        %v194 = vld [vmem:[%s182 + $0x50] sm:$0xff]
        %v195 = vld [vmem:[%s182 + $0x58] sm:$0x3]
        %v196 = vcombine.low %v184, %v190
        %v197 = vcombine.high %v184, %v190
        %v199 = vunpack.c.l.s4 1983009808
        %v200 = vunpack.c.0.s8 %v199
        %v201 = vlaneseq
        %v202 = vshrl.u32 %v201, 7
        %v203 = vsub.s32 %v200, %v202
        %v204 = vrot.slane %v196, %v203
        %v206 = vunpack.c.l.s4 1983009808
        %v207 = vunpack.c.0.s8 %v206
        %v208 = vlaneseq
        %v209 = vshrl.u32 %v208, 7
        %v210 = vsub.s32 %v207, %v209
        %v211 = vrot.slane %v197, %v210
        %v212 = vcombine.low %v187, %v193
        %v213 = vcombine.high %v187, %v193
        %v215 = vunpack.c.l.s4 1983009808
        %v216 = vunpack.c.0.s8 %v215
        %v217 = vlaneseq
        %v218 = vshrl.u32 %v217, 7
        %v219 = vsub.s32 %v216, %v218
        %v220 = vrot.slane %v212, %v219
        %v222 = vunpack.c.l.s4 1983009808
        %v223 = vunpack.c.0.s8 %v222
        %v224 = vlaneseq
        %v225 = vshrl.u32 %v224, 7
        %v226 = vsub.s32 %v223, %v225
        %v227 = vrot.slane %v213, %v226
        %v228 = vcombine.low %v204, %v220
        %v229 = vcombine.high %v204, %v220
        %v231 = vunpack.c.l.s4 1934713408
        %v232 = vunpack.c.0.s8 %v231
        %v233 = vlaneseq
        %v234 = vshrl.u32 %v233, 7
        %v235 = vsub.s32 %v232, %v234
        %v236 = vrot.slane %v228, %v235
        %v238 = vunpack.c.l.s4 1934713408
        %v239 = vunpack.c.0.s8 %v238
        %v240 = vlaneseq
        %v241 = vshrl.u32 %v240, 7
        %v242 = vsub.s32 %v239, %v241
        %v243 = vrot.slane %v229, %v242
        %v244 = vcombine.low %v211, %v227
        %v245 = vcombine.high %v211, %v227
        %v247 = vunpack.c.l.s4 1934713408
        %v248 = vunpack.c.0.s8 %v247
        %v249 = vlaneseq
        %v250 = vshrl.u32 %v249, 7
        %v251 = vsub.s32 %v248, %v250
        %v252 = vrot.slane %v244, %v251
        %v254 = vunpack.c.l.s4 1934713408
        %v255 = vunpack.c.0.s8 %v254
        %v256 = vlaneseq
        %v257 = vshrl.u32 %v256, 7
        %v258 = vsub.s32 %v255, %v257
        %v259 = vrot.slane %v245, %v258
        %v260 = vcombine.high %v236, 0.0
        %v261 = vcombine.high %v243, 0.0
        %v262 = vcombine.high %v252, 0.0
        %v263 = vcombine.high %v259, 0.0
        %v264 = vcombine.low %v185, %v191
        %v265 = vcombine.high %v185, %v191
        %v267 = vunpack.c.l.s4 1983009808
        %v268 = vunpack.c.0.s8 %v267
        %v269 = vlaneseq
        %v270 = vshrl.u32 %v269, 7
        %v271 = vsub.s32 %v268, %v270
        %v272 = vrot.slane %v264, %v271
        %v274 = vunpack.c.l.s4 1983009808
        %v275 = vunpack.c.0.s8 %v274
        %v276 = vlaneseq
        %v277 = vshrl.u32 %v276, 7
        %v278 = vsub.s32 %v275, %v277
        %v279 = vrot.slane %v265, %v278
        %v280 = vcombine.low %v188, %v194
        %v281 = vcombine.high %v188, %v194
        %v283 = vunpack.c.l.s4 1983009808
        %v284 = vunpack.c.0.s8 %v283
        %v285 = vlaneseq
        %v286 = vshrl.u32 %v285, 7
        %v287 = vsub.s32 %v284, %v286
        %v288 = vrot.slane %v280, %v287
        %v290 = vunpack.c.l.s4 1983009808
        %v291 = vunpack.c.0.s8 %v290
        %v292 = vlaneseq
        %v293 = vshrl.u32 %v292, 7
        %v294 = vsub.s32 %v291, %v293
        %v295 = vrot.slane %v281, %v294
        %v296 = vcombine.low %v272, %v288
        %v297 = vcombine.high %v272, %v288
        %v299 = vunpack.c.l.s4 1934713408
        %v300 = vunpack.c.0.s8 %v299
        %v301 = vlaneseq
        %v302 = vshrl.u32 %v301, 7
        %v303 = vsub.s32 %v300, %v302
        %v304 = vrot.slane %v296, %v303
        %v306 = vunpack.c.l.s4 1934713408
        %v307 = vunpack.c.0.s8 %v306
        %v308 = vlaneseq
        %v309 = vshrl.u32 %v308, 7
        %v310 = vsub.s32 %v307, %v309
        %v311 = vrot.slane %v297, %v310
        %v312 = vcombine.low %v279, %v295
        %v313 = vcombine.high %v279, %v295
        %v315 = vunpack.c.l.s4 1934713408
        %v316 = vunpack.c.0.s8 %v315
        %v317 = vlaneseq
        %v318 = vshrl.u32 %v317, 7
        %v319 = vsub.s32 %v316, %v318
        %v320 = vrot.slane %v312, %v319
        %v322 = vunpack.c.l.s4 1934713408
        %v323 = vunpack.c.0.s8 %v322
        %v324 = vlaneseq
        %v325 = vshrl.u32 %v324, 7
        %v326 = vsub.s32 %v323, %v325
        %v327 = vrot.slane %v313, %v326
        %v328 = vcombine.high %v304, 0.0
        %v329 = vcombine.high %v311, 0.0
        %v330 = vcombine.high %v320, 0.0
        %v331 = vcombine.high %v327, 0.0
        %333 = vrot.lane.b32.xlu0 %v260, 16
        %v334 = vpop.permute.xlu0 %333
        %337 = vrot.lane.b32.xlu0 %v243, 32
        %v338 = vpop.permute.xlu0 %337
        %341 = vrot.lane.b32.xlu0 %v261, 48
        %v342 = vpop.permute.xlu0 %341
        %345 = vrot.lane.b32.xlu0 %v252, 64
        %v346 = vpop.permute.xlu0 %345
        %349 = vrot.lane.b32.xlu0 %v262, 80
        %v350 = vpop.permute.xlu0 %349
        %353 = vrot.lane.b32.xlu0 %v259, 96
        %v354 = vpop.permute.xlu0 %353
        %357 = vrot.lane.b32.xlu0 %v263, 112
        %v358 = vpop.permute.xlu0 %357
        %361 = vrot.lane.b32.xlu0 %v328, 16
        %v362 = vpop.permute.xlu0 %361
        %365 = vrot.lane.b32.xlu0 %v311, 32
        %v366 = vpop.permute.xlu0 %365
        %369 = vrot.lane.b32.xlu0 %v329, 48
        %v370 = vpop.permute.xlu0 %369
        %373 = vrot.lane.b32.xlu0 %v320, 64
        %v374 = vpop.permute.xlu0 %373
        %377 = vrot.lane.b32.xlu0 %v330, 80
        %v378 = vpop.permute.xlu0 %377
        %381 = vrot.lane.b32.xlu0 %v327, 96
        %v382 = vpop.permute.xlu0 %381
        %385 = vrot.lane.b32.xlu0 %v331, 112
        %v386 = vpop.permute.xlu0 %385
        %vm388 = vcmask 130048
        %v389 = vsel %vm388, %v236, %v334
        %vm390 = vcmask 261120
        %v391 = vsel %vm390, %v389, %v338
        %vm392 = vcmask 392192
        %v393 = vsel %vm392, %v391, %v342
        %vm394 = vcmask 523264
        %v395 = vsel %vm394, %v393, %v346
        %vm396 = vcmask 654336
        %v397 = vsel %vm396, %v395, %v350
        %vm398 = vcmask 785408
        %v399 = vsel %vm398, %v397, %v354
        %vm400 = vcmask 916480
        %v401 = vsel %vm400, %v399, %v358
        %v402 = vsel %vm388, %v304, %v362
        %v403 = vsel %vm390, %v402, %v366
        %v404 = vsel %vm392, %v403, %v370
        %v405 = vsel %vm394, %v404, %v374
        %v406 = vsel %vm396, %v405, %v378
        %v407 = vsel %vm398, %v406, %v382
        %v408 = vsel %vm400, %v407, %v386
        %417 = vrot.lane.b32.xlu0 %v184, 127
        %v418 = vpop.permute.xlu0 %417
        %419 = vrot.lane.b32.xlu0 %v185, 127
        %v420 = vpop.permute.xlu0 %419
        %421 = vrot.lane.b32.xlu0 %v187, 127
        %v422 = vpop.permute.xlu0 %421
        %423 = vrot.lane.b32.xlu0 %v188, 127
        %v424 = vpop.permute.xlu0 %423
        %425 = vrot.lane.b32.xlu0 %v190, 127
        %v426 = vpop.permute.xlu0 %425
        %427 = vrot.lane.b32.xlu0 %v191, 127
        %v428 = vpop.permute.xlu0 %427
        %429 = vrot.lane.b32.xlu0 %v193, 127
        %v430 = vpop.permute.xlu0 %429
        %431 = vrot.lane.b32.xlu0 %v194, 127
        %v432 = vpop.permute.xlu0 %431
        %v441 = vcombine.low %v418, %v426
        %v442 = vcombine.high %v418, %v426
        %v444 = vunpack.c.l.s4 1983009808
        %v445 = vunpack.c.0.s8 %v444
        %v446 = vlaneseq
        %v447 = vshrl.u32 %v446, 7
        %v448 = vsub.s32 %v445, %v447
        %v449 = vrot.slane %v441, %v448
        %v451 = vunpack.c.l.s4 1983009808
        %v452 = vunpack.c.0.s8 %v451
        %v453 = vlaneseq
        %v454 = vshrl.u32 %v453, 7
        %v455 = vsub.s32 %v452, %v454
        %v456 = vrot.slane %v442, %v455
        %v457 = vcombine.low %v422, %v430
        %v458 = vcombine.high %v422, %v430
        %v460 = vunpack.c.l.s4 1983009808
        %v461 = vunpack.c.0.s8 %v460
        %v462 = vlaneseq
        %v463 = vshrl.u32 %v462, 7
        %v464 = vsub.s32 %v461, %v463
        %v465 = vrot.slane %v457, %v464
        %v467 = vunpack.c.l.s4 1983009808
        %v468 = vunpack.c.0.s8 %v467
        %v469 = vlaneseq
        %v470 = vshrl.u32 %v469, 7
        %v471 = vsub.s32 %v468, %v470
        %v472 = vrot.slane %v458, %v471
        %v473 = vcombine.low %v449, %v465
        %v474 = vcombine.high %v449, %v465
        %v476 = vunpack.c.l.s4 1934713408
        %v477 = vunpack.c.0.s8 %v476
        %v478 = vlaneseq
        %v479 = vshrl.u32 %v478, 7
        %v480 = vsub.s32 %v477, %v479
        %v481 = vrot.slane %v473, %v480
        %v483 = vunpack.c.l.s4 1934713408
        %v484 = vunpack.c.0.s8 %v483
        %v485 = vlaneseq
        %v486 = vshrl.u32 %v485, 7
        %v487 = vsub.s32 %v484, %v486
        %v488 = vrot.slane %v474, %v487
        %v489 = vcombine.low %v456, %v472
        %v490 = vcombine.high %v456, %v472
        %v492 = vunpack.c.l.s4 1934713408
        %v493 = vunpack.c.0.s8 %v492
        %v494 = vlaneseq
        %v495 = vshrl.u32 %v494, 7
        %v496 = vsub.s32 %v493, %v495
        %v497 = vrot.slane %v489, %v496
        %v499 = vunpack.c.l.s4 1934713408
        %v500 = vunpack.c.0.s8 %v499
        %v501 = vlaneseq
        %v502 = vshrl.u32 %v501, 7
        %v503 = vsub.s32 %v500, %v502
        %v504 = vrot.slane %v490, %v503
        %v505 = vcombine.high %v481, 0.0
        %v506 = vcombine.high %v488, 0.0
        %v507 = vcombine.high %v497, 0.0
        %v508 = vcombine.high %v504, 0.0
        %v509 = vcombine.low %v420, %v428
        %v510 = vcombine.high %v420, %v428
        %v512 = vunpack.c.l.s4 1983009808
        %v513 = vunpack.c.0.s8 %v512
        %v514 = vlaneseq
        %v515 = vshrl.u32 %v514, 7
        %v516 = vsub.s32 %v513, %v515
        %v517 = vrot.slane %v509, %v516
        %v519 = vunpack.c.l.s4 1983009808
        %v520 = vunpack.c.0.s8 %v519
        %v521 = vlaneseq
        %v522 = vshrl.u32 %v521, 7
        %v523 = vsub.s32 %v520, %v522
        %v524 = vrot.slane %v510, %v523
        %v525 = vcombine.low %v424, %v432
        %v526 = vcombine.high %v424, %v432
        %v528 = vunpack.c.l.s4 1983009808
        %v529 = vunpack.c.0.s8 %v528
        %v530 = vlaneseq
        %v531 = vshrl.u32 %v530, 7
        %v532 = vsub.s32 %v529, %v531
        %v533 = vrot.slane %v525, %v532
        %v535 = vunpack.c.l.s4 1983009808
        %v536 = vunpack.c.0.s8 %v535
        %v537 = vlaneseq
        %v538 = vshrl.u32 %v537, 7
        %v539 = vsub.s32 %v536, %v538
        %v540 = vrot.slane %v526, %v539
        %v541 = vcombine.low %v517, %v533
        %v542 = vcombine.high %v517, %v533
        %v544 = vunpack.c.l.s4 1934713408
        %v545 = vunpack.c.0.s8 %v544
        %v546 = vlaneseq
        %v547 = vshrl.u32 %v546, 7
        %v548 = vsub.s32 %v545, %v547
        %v549 = vrot.slane %v541, %v548
        %v551 = vunpack.c.l.s4 1934713408
        %v552 = vunpack.c.0.s8 %v551
        %v553 = vlaneseq
        %v554 = vshrl.u32 %v553, 7
        %v555 = vsub.s32 %v552, %v554
        %v556 = vrot.slane %v542, %v555
        %v557 = vcombine.low %v524, %v540
        %v558 = vcombine.high %v524, %v540
        %v560 = vunpack.c.l.s4 1934713408
        %v561 = vunpack.c.0.s8 %v560
        %v562 = vlaneseq
        %v563 = vshrl.u32 %v562, 7
        %v564 = vsub.s32 %v561, %v563
        %v565 = vrot.slane %v557, %v564
        %v567 = vunpack.c.l.s4 1934713408
        %v568 = vunpack.c.0.s8 %v567
        %v569 = vlaneseq
        %v570 = vshrl.u32 %v569, 7
        %v571 = vsub.s32 %v568, %v570
        %v572 = vrot.slane %v558, %v571
        %v573 = vcombine.high %v549, 0.0
        %v574 = vcombine.high %v556, 0.0
        %v575 = vcombine.high %v565, 0.0
        %v576 = vcombine.high %v572, 0.0
        %578 = vrot.lane.b32.xlu0 %v505, 16
        %v579 = vpop.permute.xlu0 %578
        %582 = vrot.lane.b32.xlu0 %v488, 32
        %v583 = vpop.permute.xlu0 %582
        %586 = vrot.lane.b32.xlu0 %v506, 48
        %v587 = vpop.permute.xlu0 %586
        %590 = vrot.lane.b32.xlu0 %v497, 64
        %v591 = vpop.permute.xlu0 %590
        %594 = vrot.lane.b32.xlu0 %v507, 80
        %v595 = vpop.permute.xlu0 %594
        %598 = vrot.lane.b32.xlu0 %v504, 96
        %v599 = vpop.permute.xlu0 %598
        %602 = vrot.lane.b32.xlu0 %v508, 112
        %v603 = vpop.permute.xlu0 %602
        %606 = vrot.lane.b32.xlu0 %v573, 16
        %v607 = vpop.permute.xlu0 %606
        %610 = vrot.lane.b32.xlu0 %v556, 32
        %v611 = vpop.permute.xlu0 %610
        %614 = vrot.lane.b32.xlu0 %v574, 48
        %v615 = vpop.permute.xlu0 %614
        %618 = vrot.lane.b32.xlu0 %v565, 64
        %v619 = vpop.permute.xlu0 %618
        %622 = vrot.lane.b32.xlu0 %v575, 80
        %v623 = vpop.permute.xlu0 %622
        %626 = vrot.lane.b32.xlu0 %v572, 96
        %v627 = vpop.permute.xlu0 %626
        %630 = vrot.lane.b32.xlu0 %v576, 112
        %v631 = vpop.permute.xlu0 %630
        %v633 = vsel %vm388, %v481, %v579
        %v634 = vsel %vm390, %v633, %v583
        %v635 = vsel %vm392, %v634, %v587
        %v636 = vsel %vm394, %v635, %v591
        %v637 = vsel %vm396, %v636, %v595
        %v638 = vsel %vm398, %v637, %v599
        %v639 = vsel %vm400, %v638, %v603
        %v640 = vsel %vm388, %v549, %v607
        %v641 = vsel %vm390, %v640, %v611
        %v642 = vsel %vm392, %v641, %v615
        %v643 = vsel %vm394, %v642, %v619
        %v644 = vsel %vm396, %v643, %v623
        %v645 = vsel %vm398, %v644, %v627
        %v646 = vsel %vm400, %v645, %v631
        %647 = vrot.lane.b32.xlu0 %v184, 126
        %v648 = vpop.permute.xlu0 %647
        %649 = vrot.lane.b32.xlu0 %v185, 126
        %v650 = vpop.permute.xlu0 %649
        %651 = vrot.lane.b32.xlu0 %v187, 126
        %v652 = vpop.permute.xlu0 %651
        %653 = vrot.lane.b32.xlu0 %v188, 126
        %v654 = vpop.permute.xlu0 %653
        %655 = vrot.lane.b32.xlu0 %v190, 126
        %v656 = vpop.permute.xlu0 %655
        %657 = vrot.lane.b32.xlu0 %v191, 126
        %v658 = vpop.permute.xlu0 %657
        %659 = vrot.lane.b32.xlu0 %v193, 126
        %v660 = vpop.permute.xlu0 %659
        %661 = vrot.lane.b32.xlu0 %v194, 126
        %v662 = vpop.permute.xlu0 %661
        %v671 = vcombine.low %v648, %v656
        %v672 = vcombine.high %v648, %v656
        %v674 = vunpack.c.l.s4 1983009808
        %v675 = vunpack.c.0.s8 %v674
        %v676 = vlaneseq
        %v677 = vshrl.u32 %v676, 7
        %v678 = vsub.s32 %v675, %v677
        %v679 = vrot.slane %v671, %v678
        %v681 = vunpack.c.l.s4 1983009808
        %v682 = vunpack.c.0.s8 %v681
        %v683 = vlaneseq
        %v684 = vshrl.u32 %v683, 7
        %v685 = vsub.s32 %v682, %v684
        %v686 = vrot.slane %v672, %v685
        %v687 = vcombine.low %v652, %v660
        %v688 = vcombine.high %v652, %v660
        %v690 = vunpack.c.l.s4 1983009808
        %v691 = vunpack.c.0.s8 %v690
        %v692 = vlaneseq
        %v693 = vshrl.u32 %v692, 7
        %v694 = vsub.s32 %v691, %v693
        %v695 = vrot.slane %v687, %v694
        %v697 = vunpack.c.l.s4 1983009808
        %v698 = vunpack.c.0.s8 %v697
        %v699 = vlaneseq
        %v700 = vshrl.u32 %v699, 7
        %v701 = vsub.s32 %v698, %v700
        %v702 = vrot.slane %v688, %v701
        %v703 = vcombine.low %v679, %v695
        %v704 = vcombine.high %v679, %v695
        %v706 = vunpack.c.l.s4 1934713408
        %v707 = vunpack.c.0.s8 %v706
        %v708 = vlaneseq
        %v709 = vshrl.u32 %v708, 7
        %v710 = vsub.s32 %v707, %v709
        %v711 = vrot.slane %v703, %v710
        %v713 = vunpack.c.l.s4 1934713408
        %v714 = vunpack.c.0.s8 %v713
        %v715 = vlaneseq
        %v716 = vshrl.u32 %v715, 7
        %v717 = vsub.s32 %v714, %v716
        %v718 = vrot.slane %v704, %v717
        %v719 = vcombine.low %v686, %v702
        %v720 = vcombine.high %v686, %v702
        %v722 = vunpack.c.l.s4 1934713408
        %v723 = vunpack.c.0.s8 %v722
        %v724 = vlaneseq
        %v725 = vshrl.u32 %v724, 7
        %v726 = vsub.s32 %v723, %v725
        %v727 = vrot.slane %v719, %v726
        %v729 = vunpack.c.l.s4 1934713408
        %v730 = vunpack.c.0.s8 %v729
        %v731 = vlaneseq
        %v732 = vshrl.u32 %v731, 7
        %v733 = vsub.s32 %v730, %v732
        %v734 = vrot.slane %v720, %v733
        %v735 = vcombine.high %v711, 0.0
        %v736 = vcombine.high %v718, 0.0
        %v737 = vcombine.high %v727, 0.0
        %v738 = vcombine.high %v734, 0.0
        %v739 = vcombine.low %v650, %v658
        %v740 = vcombine.high %v650, %v658
        %v742 = vunpack.c.l.s4 1983009808
        %v743 = vunpack.c.0.s8 %v742
        %v744 = vlaneseq
        %v745 = vshrl.u32 %v744, 7
        %v746 = vsub.s32 %v743, %v745
        %v747 = vrot.slane %v739, %v746
        %v749 = vunpack.c.l.s4 1983009808
        %v750 = vunpack.c.0.s8 %v749
        %v751 = vlaneseq
        %v752 = vshrl.u32 %v751, 7
        %v753 = vsub.s32 %v750, %v752
        %v754 = vrot.slane %v740, %v753
        %v755 = vcombine.low %v654, %v662
        %v756 = vcombine.high %v654, %v662
        %v758 = vunpack.c.l.s4 1983009808
        %v759 = vunpack.c.0.s8 %v758
        %v760 = vlaneseq
        %v761 = vshrl.u32 %v760, 7
        %v762 = vsub.s32 %v759, %v761
        %v763 = vrot.slane %v755, %v762
        %v765 = vunpack.c.l.s4 1983009808
        %v766 = vunpack.c.0.s8 %v765
        %v767 = vlaneseq
        %v768 = vshrl.u32 %v767, 7
        %v769 = vsub.s32 %v766, %v768
        %v770 = vrot.slane %v756, %v769
        %v771 = vcombine.low %v747, %v763
        %v772 = vcombine.high %v747, %v763
        %v774 = vunpack.c.l.s4 1934713408
        %v775 = vunpack.c.0.s8 %v774
        %v776 = vlaneseq
        %v777 = vshrl.u32 %v776, 7
        %v778 = vsub.s32 %v775, %v777
        %v779 = vrot.slane %v771, %v778
        %v781 = vunpack.c.l.s4 1934713408
        %v782 = vunpack.c.0.s8 %v781
        %v783 = vlaneseq
        %v784 = vshrl.u32 %v783, 7
        %v785 = vsub.s32 %v782, %v784
        %v786 = vrot.slane %v772, %v785
        %v787 = vcombine.low %v754, %v770
        %v788 = vcombine.high %v754, %v770
        %v790 = vunpack.c.l.s4 1934713408
        %v791 = vunpack.c.0.s8 %v790
        %v792 = vlaneseq
        %v793 = vshrl.u32 %v792, 7
        %v794 = vsub.s32 %v791, %v793
        %v795 = vrot.slane %v787, %v794
        %v797 = vunpack.c.l.s4 1934713408
        %v798 = vunpack.c.0.s8 %v797
        %v799 = vlaneseq
        %v800 = vshrl.u32 %v799, 7
        %v801 = vsub.s32 %v798, %v800
        %v802 = vrot.slane %v788, %v801
        %v803 = vcombine.high %v779, 0.0
        %v804 = vcombine.high %v786, 0.0
        %v805 = vcombine.high %v795, 0.0
        %v806 = vcombine.high %v802, 0.0
        %808 = vrot.lane.b32.xlu0 %v735, 16
        %v809 = vpop.permute.xlu0 %808
        %812 = vrot.lane.b32.xlu0 %v718, 32
        %v813 = vpop.permute.xlu0 %812
        %816 = vrot.lane.b32.xlu0 %v736, 48
        %v817 = vpop.permute.xlu0 %816
        %820 = vrot.lane.b32.xlu0 %v727, 64
        %v821 = vpop.permute.xlu0 %820
        %824 = vrot.lane.b32.xlu0 %v737, 80
        %v825 = vpop.permute.xlu0 %824
        %828 = vrot.lane.b32.xlu0 %v734, 96
        %v829 = vpop.permute.xlu0 %828
        %832 = vrot.lane.b32.xlu0 %v738, 112
        %v833 = vpop.permute.xlu0 %832
        %836 = vrot.lane.b32.xlu0 %v803, 16
        %v837 = vpop.permute.xlu0 %836
        %840 = vrot.lane.b32.xlu0 %v786, 32
        %v841 = vpop.permute.xlu0 %840
        %844 = vrot.lane.b32.xlu0 %v804, 48
        %v845 = vpop.permute.xlu0 %844
        %848 = vrot.lane.b32.xlu0 %v795, 64
        %v849 = vpop.permute.xlu0 %848
        %852 = vrot.lane.b32.xlu0 %v805, 80
        %v853 = vpop.permute.xlu0 %852
        %856 = vrot.lane.b32.xlu0 %v802, 96
        %v857 = vpop.permute.xlu0 %856
        %860 = vrot.lane.b32.xlu0 %v806, 112
        %v861 = vpop.permute.xlu0 %860
        %v863 = vsel %vm388, %v711, %v809
        %v864 = vsel %vm390, %v863, %v813
        %v865 = vsel %vm392, %v864, %v817
        %v866 = vsel %vm394, %v865, %v821
        %v867 = vsel %vm396, %v866, %v825
        %v868 = vsel %vm398, %v867, %v829
        %v869 = vsel %vm400, %v868, %v833
        %v870 = vsel %vm388, %v779, %v837
        %v871 = vsel %vm390, %v870, %v841
        %v872 = vsel %vm392, %v871, %v845
        %v873 = vsel %vm394, %v872, %v849
        %v874 = vsel %vm396, %v873, %v853
        %v875 = vsel %vm398, %v874, %v857
        %v876 = vsel %vm400, %v875, %v861
        %vm881 = vcmask 1046528
        %v882 = vrot.slane %v184, 1
        %v883 = vrot.slane %v185, 1
        %v884 = vsel %vm881, %v882, %v883
        %v885 = vrot.slane %v186, 1
        %v886 = vsel %vm881, %v883, %v885
        %v887 = vrot.slane %v187, 1
        %v888 = vrot.slane %v188, 1
        %v889 = vsel %vm881, %v887, %v888
        %v890 = vrot.slane %v189, 1
        %v891 = vsel %vm881, %v888, %v890
        %v892 = vrot.slane %v190, 1
        %v893 = vrot.slane %v191, 1
        %v894 = vsel %vm881, %v892, %v893
        %v895 = vrot.slane %v192, 1
        %v896 = vsel %vm881, %v893, %v895
        %v897 = vrot.slane %v193, 1
        %v898 = vrot.slane %v194, 1
        %v899 = vsel %vm881, %v897, %v898
        %v900 = vrot.slane %v195, 1
        %v901 = vsel %vm881, %v898, %v900
        %v910 = vcombine.low %v884, %v894
        %v911 = vcombine.high %v884, %v894
        %v913 = vunpack.c.l.s4 1983009808
        %v914 = vunpack.c.0.s8 %v913
        %v915 = vlaneseq
        %v916 = vshrl.u32 %v915, 7
        %v917 = vsub.s32 %v914, %v916
        %v918 = vrot.slane %v910, %v917
        %v920 = vunpack.c.l.s4 1983009808
        %v921 = vunpack.c.0.s8 %v920
        %v922 = vlaneseq
        %v923 = vshrl.u32 %v922, 7
        %v924 = vsub.s32 %v921, %v923
        %v925 = vrot.slane %v911, %v924
        %v926 = vcombine.low %v889, %v899
        %v927 = vcombine.high %v889, %v899
        %v929 = vunpack.c.l.s4 1983009808
        %v930 = vunpack.c.0.s8 %v929
        %v931 = vlaneseq
        %v932 = vshrl.u32 %v931, 7
        %v933 = vsub.s32 %v930, %v932
        %v934 = vrot.slane %v926, %v933
        %v936 = vunpack.c.l.s4 1983009808
        %v937 = vunpack.c.0.s8 %v936
        %v938 = vlaneseq
        %v939 = vshrl.u32 %v938, 7
        %v940 = vsub.s32 %v937, %v939
        %v941 = vrot.slane %v927, %v940
        %v942 = vcombine.low %v918, %v934
        %v943 = vcombine.high %v918, %v934
        %v945 = vunpack.c.l.s4 1934713408
        %v946 = vunpack.c.0.s8 %v945
        %v947 = vlaneseq
        %v948 = vshrl.u32 %v947, 7
        %v949 = vsub.s32 %v946, %v948
        %v950 = vrot.slane %v942, %v949
        %v952 = vunpack.c.l.s4 1934713408
        %v953 = vunpack.c.0.s8 %v952
        %v954 = vlaneseq
        %v955 = vshrl.u32 %v954, 7
        %v956 = vsub.s32 %v953, %v955
        %v957 = vrot.slane %v943, %v956
        %v958 = vcombine.low %v925, %v941
        %v959 = vcombine.high %v925, %v941
        %v961 = vunpack.c.l.s4 1934713408
        %v962 = vunpack.c.0.s8 %v961
        %v963 = vlaneseq
        %v964 = vshrl.u32 %v963, 7
        %v965 = vsub.s32 %v962, %v964
        %v966 = vrot.slane %v958, %v965
        %v968 = vunpack.c.l.s4 1934713408
        %v969 = vunpack.c.0.s8 %v968
        %v970 = vlaneseq
        %v971 = vshrl.u32 %v970, 7
        %v972 = vsub.s32 %v969, %v971
        %v973 = vrot.slane %v959, %v972
        %v974 = vcombine.high %v950, 0.0
        %v975 = vcombine.high %v957, 0.0
        %v976 = vcombine.high %v966, 0.0
        %v977 = vcombine.high %v973, 0.0
        %v978 = vcombine.low %v886, %v896
        %v979 = vcombine.high %v886, %v896
        %v981 = vunpack.c.l.s4 1983009808
        %v982 = vunpack.c.0.s8 %v981
        %v983 = vlaneseq
        %v984 = vshrl.u32 %v983, 7
        %v985 = vsub.s32 %v982, %v984
        %v986 = vrot.slane %v978, %v985
        %v988 = vunpack.c.l.s4 1983009808
        %v989 = vunpack.c.0.s8 %v988
        %v990 = vlaneseq
        %v991 = vshrl.u32 %v990, 7
        %v992 = vsub.s32 %v989, %v991
        %v993 = vrot.slane %v979, %v992
        %v994 = vcombine.low %v891, %v901
        %v995 = vcombine.high %v891, %v901
        %v997 = vunpack.c.l.s4 1983009808
        %v998 = vunpack.c.0.s8 %v997
        %v999 = vlaneseq
        %v1000 = vshrl.u32 %v999, 7
        %v1001 = vsub.s32 %v998, %v1000
        %v1002 = vrot.slane %v994, %v1001
        %v1004 = vunpack.c.l.s4 1983009808
        %v1005 = vunpack.c.0.s8 %v1004
        %v1006 = vlaneseq
        %v1007 = vshrl.u32 %v1006, 7
        %v1008 = vsub.s32 %v1005, %v1007
        %v1009 = vrot.slane %v995, %v1008
        %v1010 = vcombine.low %v986, %v1002
        %v1011 = vcombine.high %v986, %v1002
        %v1013 = vunpack.c.l.s4 1934713408
        %v1014 = vunpack.c.0.s8 %v1013
        %v1015 = vlaneseq
        %v1016 = vshrl.u32 %v1015, 7
        %v1017 = vsub.s32 %v1014, %v1016
        %v1018 = vrot.slane %v1010, %v1017
        %v1020 = vunpack.c.l.s4 1934713408
        %v1021 = vunpack.c.0.s8 %v1020
        %v1022 = vlaneseq
        %v1023 = vshrl.u32 %v1022, 7
        %v1024 = vsub.s32 %v1021, %v1023
        %v1025 = vrot.slane %v1011, %v1024
        %v1026 = vcombine.low %v993, %v1009
        %v1027 = vcombine.high %v993, %v1009
        %v1029 = vunpack.c.l.s4 1934713408
        %v1030 = vunpack.c.0.s8 %v1029
        %v1031 = vlaneseq
        %v1032 = vshrl.u32 %v1031, 7
        %v1033 = vsub.s32 %v1030, %v1032
        %v1034 = vrot.slane %v1026, %v1033
        %v1036 = vunpack.c.l.s4 1934713408
        %v1037 = vunpack.c.0.s8 %v1036
        %v1038 = vlaneseq
        %v1039 = vshrl.u32 %v1038, 7
        %v1040 = vsub.s32 %v1037, %v1039
        %v1041 = vrot.slane %v1027, %v1040
        %v1042 = vcombine.high %v1018, 0.0
        %v1043 = vcombine.high %v1025, 0.0
        %v1044 = vcombine.high %v1034, 0.0
        %v1045 = vcombine.high %v1041, 0.0
        %1047 = vrot.lane.b32.xlu0 %v974, 16
        %v1048 = vpop.permute.xlu0 %1047
        %1051 = vrot.lane.b32.xlu0 %v957, 32
        %v1052 = vpop.permute.xlu0 %1051
        %1055 = vrot.lane.b32.xlu0 %v975, 48
        %v1056 = vpop.permute.xlu0 %1055
        %1059 = vrot.lane.b32.xlu0 %v966, 64
        %v1060 = vpop.permute.xlu0 %1059
        %1063 = vrot.lane.b32.xlu0 %v976, 80
        %v1064 = vpop.permute.xlu0 %1063
        %1067 = vrot.lane.b32.xlu0 %v973, 96
        %v1068 = vpop.permute.xlu0 %1067
        %1071 = vrot.lane.b32.xlu0 %v977, 112
        %v1072 = vpop.permute.xlu0 %1071
        %1075 = vrot.lane.b32.xlu0 %v1042, 16
        %v1076 = vpop.permute.xlu0 %1075
        %1079 = vrot.lane.b32.xlu0 %v1025, 32
        %v1080 = vpop.permute.xlu0 %1079
        %1083 = vrot.lane.b32.xlu0 %v1043, 48
        %v1084 = vpop.permute.xlu0 %1083
        %1087 = vrot.lane.b32.xlu0 %v1034, 64
        %v1088 = vpop.permute.xlu0 %1087
        %1091 = vrot.lane.b32.xlu0 %v1044, 80
        %v1092 = vpop.permute.xlu0 %1091
        %1095 = vrot.lane.b32.xlu0 %v1041, 96
        %v1096 = vpop.permute.xlu0 %1095
        %1099 = vrot.lane.b32.xlu0 %v1045, 112
        %v1100 = vpop.permute.xlu0 %1099
        %v1102 = vsel %vm388, %v950, %v1048
        %v1103 = vsel %vm390, %v1102, %v1052
        %v1104 = vsel %vm392, %v1103, %v1056
        %v1105 = vsel %vm394, %v1104, %v1060
        %v1106 = vsel %vm396, %v1105, %v1064
        %v1107 = vsel %vm398, %v1106, %v1068
        %v1108 = vsel %vm400, %v1107, %v1072
        %v1109 = vsel %vm388, %v1018, %v1076
        %v1110 = vsel %vm390, %v1109, %v1080
        %v1111 = vsel %vm392, %v1110, %v1084
        %v1112 = vsel %vm394, %v1111, %v1088
        %v1113 = vsel %vm396, %v1112, %v1092
        %v1114 = vsel %vm398, %v1113, %v1096
        %v1115 = vsel %vm400, %v1114, %v1100
        %1116 = vrot.lane.b32.xlu0 %v884, 127
        %v1117 = vpop.permute.xlu0 %1116
        %1118 = vrot.lane.b32.xlu0 %v886, 127
        %v1119 = vpop.permute.xlu0 %1118
        %1120 = vrot.lane.b32.xlu0 %v889, 127
        %v1121 = vpop.permute.xlu0 %1120
        %1122 = vrot.lane.b32.xlu0 %v891, 127
        %v1123 = vpop.permute.xlu0 %1122
        %1124 = vrot.lane.b32.xlu0 %v894, 127
        %v1125 = vpop.permute.xlu0 %1124
        %1126 = vrot.lane.b32.xlu0 %v896, 127
        %v1127 = vpop.permute.xlu0 %1126
        %1128 = vrot.lane.b32.xlu0 %v899, 127
        %v1129 = vpop.permute.xlu0 %1128
        %1130 = vrot.lane.b32.xlu0 %v901, 127
        %v1131 = vpop.permute.xlu0 %1130
        %v1140 = vcombine.low %v1117, %v1125
        %v1141 = vcombine.high %v1117, %v1125
        %v1143 = vunpack.c.l.s4 1983009808
        %v1144 = vunpack.c.0.s8 %v1143
        %v1145 = vlaneseq
        %v1146 = vshrl.u32 %v1145, 7
        %v1147 = vsub.s32 %v1144, %v1146
        %v1148 = vrot.slane %v1140, %v1147
        %v1150 = vunpack.c.l.s4 1983009808
        %v1151 = vunpack.c.0.s8 %v1150
        %v1152 = vlaneseq
        %v1153 = vshrl.u32 %v1152, 7
        %v1154 = vsub.s32 %v1151, %v1153
        %v1155 = vrot.slane %v1141, %v1154
        %v1156 = vcombine.low %v1121, %v1129
        %v1157 = vcombine.high %v1121, %v1129
        %v1159 = vunpack.c.l.s4 1983009808
        %v1160 = vunpack.c.0.s8 %v1159
        %v1161 = vlaneseq
        %v1162 = vshrl.u32 %v1161, 7
        %v1163 = vsub.s32 %v1160, %v1162
        %v1164 = vrot.slane %v1156, %v1163
        %v1166 = vunpack.c.l.s4 1983009808
        %v1167 = vunpack.c.0.s8 %v1166
        %v1168 = vlaneseq
        %v1169 = vshrl.u32 %v1168, 7
        %v1170 = vsub.s32 %v1167, %v1169
        %v1171 = vrot.slane %v1157, %v1170
        %v1172 = vcombine.low %v1148, %v1164
        %v1173 = vcombine.high %v1148, %v1164
        %v1175 = vunpack.c.l.s4 1934713408
        %v1176 = vunpack.c.0.s8 %v1175
        %v1177 = vlaneseq
        %v1178 = vshrl.u32 %v1177, 7
        %v1179 = vsub.s32 %v1176, %v1178
        %v1180 = vrot.slane %v1172, %v1179
        %v1182 = vunpack.c.l.s4 1934713408
        %v1183 = vunpack.c.0.s8 %v1182
        %v1184 = vlaneseq
        %v1185 = vshrl.u32 %v1184, 7
        %v1186 = vsub.s32 %v1183, %v1185
        %v1187 = vrot.slane %v1173, %v1186
        %v1188 = vcombine.low %v1155, %v1171
        %v1189 = vcombine.high %v1155, %v1171
        %v1191 = vunpack.c.l.s4 1934713408
        %v1192 = vunpack.c.0.s8 %v1191
        %v1193 = vlaneseq
        %v1194 = vshrl.u32 %v1193, 7
        %v1195 = vsub.s32 %v1192, %v1194
        %v1196 = vrot.slane %v1188, %v1195
        %v1198 = vunpack.c.l.s4 1934713408
        %v1199 = vunpack.c.0.s8 %v1198
        %v1200 = vlaneseq
        %v1201 = vshrl.u32 %v1200, 7
        %v1202 = vsub.s32 %v1199, %v1201
        %v1203 = vrot.slane %v1189, %v1202
        %v1204 = vcombine.high %v1180, 0.0
        %v1205 = vcombine.high %v1187, 0.0
        %v1206 = vcombine.high %v1196, 0.0
        %v1207 = vcombine.high %v1203, 0.0
        %v1208 = vcombine.low %v1119, %v1127
        %v1209 = vcombine.high %v1119, %v1127
        %v1211 = vunpack.c.l.s4 1983009808
        %v1212 = vunpack.c.0.s8 %v1211
        %v1213 = vlaneseq
        %v1214 = vshrl.u32 %v1213, 7
        %v1215 = vsub.s32 %v1212, %v1214
        %v1216 = vrot.slane %v1208, %v1215
        %v1218 = vunpack.c.l.s4 1983009808
        %v1219 = vunpack.c.0.s8 %v1218
        %v1220 = vlaneseq
        %v1221 = vshrl.u32 %v1220, 7
        %v1222 = vsub.s32 %v1219, %v1221
        %v1223 = vrot.slane %v1209, %v1222
        %v1224 = vcombine.low %v1123, %v1131
        %v1225 = vcombine.high %v1123, %v1131
        %v1227 = vunpack.c.l.s4 1983009808
        %v1228 = vunpack.c.0.s8 %v1227
        %v1229 = vlaneseq
        %v1230 = vshrl.u32 %v1229, 7
        %v1231 = vsub.s32 %v1228, %v1230
        %v1232 = vrot.slane %v1224, %v1231
        %v1234 = vunpack.c.l.s4 1983009808
        %v1235 = vunpack.c.0.s8 %v1234
        %v1236 = vlaneseq
        %v1237 = vshrl.u32 %v1236, 7
        %v1238 = vsub.s32 %v1235, %v1237
        %v1239 = vrot.slane %v1225, %v1238
        %v1240 = vcombine.low %v1216, %v1232
        %v1241 = vcombine.high %v1216, %v1232
        %v1243 = vunpack.c.l.s4 1934713408
        %v1244 = vunpack.c.0.s8 %v1243
        %v1245 = vlaneseq
        %v1246 = vshrl.u32 %v1245, 7
        %v1247 = vsub.s32 %v1244, %v1246
        %v1248 = vrot.slane %v1240, %v1247
        %v1250 = vunpack.c.l.s4 1934713408
        %v1251 = vunpack.c.0.s8 %v1250
        %v1252 = vlaneseq
        %v1253 = vshrl.u32 %v1252, 7
        %v1254 = vsub.s32 %v1251, %v1253
        %v1255 = vrot.slane %v1241, %v1254
        %v1256 = vcombine.low %v1223, %v1239
        %v1257 = vcombine.high %v1223, %v1239
        %v1259 = vunpack.c.l.s4 1934713408
        %v1260 = vunpack.c.0.s8 %v1259
        %v1261 = vlaneseq
        %v1262 = vshrl.u32 %v1261, 7
        %v1263 = vsub.s32 %v1260, %v1262
        %v1264 = vrot.slane %v1256, %v1263
        %v1266 = vunpack.c.l.s4 1934713408
        %v1267 = vunpack.c.0.s8 %v1266
        %v1268 = vlaneseq
        %v1269 = vshrl.u32 %v1268, 7
        %v1270 = vsub.s32 %v1267, %v1269
        %v1271 = vrot.slane %v1257, %v1270
        %v1272 = vcombine.high %v1248, 0.0
        %v1273 = vcombine.high %v1255, 0.0
        %v1274 = vcombine.high %v1264, 0.0
        %v1275 = vcombine.high %v1271, 0.0
        %1277 = vrot.lane.b32.xlu0 %v1204, 16
        %v1278 = vpop.permute.xlu0 %1277
        %1281 = vrot.lane.b32.xlu0 %v1187, 32
        %v1282 = vpop.permute.xlu0 %1281
        %1285 = vrot.lane.b32.xlu0 %v1205, 48
        %v1286 = vpop.permute.xlu0 %1285
        %1289 = vrot.lane.b32.xlu0 %v1196, 64
        %v1290 = vpop.permute.xlu0 %1289
        %1293 = vrot.lane.b32.xlu0 %v1206, 80
        %v1294 = vpop.permute.xlu0 %1293
        %1297 = vrot.lane.b32.xlu0 %v1203, 96
        %v1298 = vpop.permute.xlu0 %1297
        %1301 = vrot.lane.b32.xlu0 %v1207, 112
        %v1302 = vpop.permute.xlu0 %1301
        %1305 = vrot.lane.b32.xlu0 %v1272, 16
        %v1306 = vpop.permute.xlu0 %1305
        %1309 = vrot.lane.b32.xlu0 %v1255, 32
        %v1310 = vpop.permute.xlu0 %1309
        %1313 = vrot.lane.b32.xlu0 %v1273, 48
        %v1314 = vpop.permute.xlu0 %1313
        %1317 = vrot.lane.b32.xlu0 %v1264, 64
        %v1318 = vpop.permute.xlu0 %1317
        %1321 = vrot.lane.b32.xlu0 %v1274, 80
        %v1322 = vpop.permute.xlu0 %1321
        %1325 = vrot.lane.b32.xlu0 %v1271, 96
        %v1326 = vpop.permute.xlu0 %1325
        %1329 = vrot.lane.b32.xlu0 %v1275, 112
        %v1330 = vpop.permute.xlu0 %1329
        %v1332 = vsel %vm388, %v1180, %v1278
        %v1333 = vsel %vm390, %v1332, %v1282
        %v1334 = vsel %vm392, %v1333, %v1286
        %v1335 = vsel %vm394, %v1334, %v1290
        %v1336 = vsel %vm396, %v1335, %v1294
        %v1337 = vsel %vm398, %v1336, %v1298
        %v1338 = vsel %vm400, %v1337, %v1302
        %v1339 = vsel %vm388, %v1248, %v1306
        %v1340 = vsel %vm390, %v1339, %v1310
        %v1341 = vsel %vm392, %v1340, %v1314
        %v1342 = vsel %vm394, %v1341, %v1318
        %v1343 = vsel %vm396, %v1342, %v1322
        %v1344 = vsel %vm398, %v1343, %v1326
        %v1345 = vsel %vm400, %v1344, %v1330
        %1346 = vrot.lane.b32.xlu0 %v884, 126
        %v1347 = vpop.permute.xlu0 %1346
        %1348 = vrot.lane.b32.xlu0 %v886, 126
        %v1349 = vpop.permute.xlu0 %1348
        %1350 = vrot.lane.b32.xlu0 %v889, 126
        %v1351 = vpop.permute.xlu0 %1350
        %1352 = vrot.lane.b32.xlu0 %v891, 126
        %v1353 = vpop.permute.xlu0 %1352
        %1354 = vrot.lane.b32.xlu0 %v894, 126
        %v1355 = vpop.permute.xlu0 %1354
        %1356 = vrot.lane.b32.xlu0 %v896, 126
        %v1357 = vpop.permute.xlu0 %1356
        %1358 = vrot.lane.b32.xlu0 %v899, 126
        %v1359 = vpop.permute.xlu0 %1358
        %1360 = vrot.lane.b32.xlu0 %v901, 126
        %v1361 = vpop.permute.xlu0 %1360
        %v1370 = vcombine.low %v1347, %v1355
        %v1371 = vcombine.high %v1347, %v1355
        %v1373 = vunpack.c.l.s4 1983009808
        %v1374 = vunpack.c.0.s8 %v1373
        %v1375 = vlaneseq
        %v1376 = vshrl.u32 %v1375, 7
        %v1377 = vsub.s32 %v1374, %v1376
        %v1378 = vrot.slane %v1370, %v1377
        %v1380 = vunpack.c.l.s4 1983009808
        %v1381 = vunpack.c.0.s8 %v1380
        %v1382 = vlaneseq
        %v1383 = vshrl.u32 %v1382, 7
        %v1384 = vsub.s32 %v1381, %v1383
        %v1385 = vrot.slane %v1371, %v1384
        %v1386 = vcombine.low %v1351, %v1359
        %v1387 = vcombine.high %v1351, %v1359
        %v1389 = vunpack.c.l.s4 1983009808
        %v1390 = vunpack.c.0.s8 %v1389
        %v1391 = vlaneseq
        %v1392 = vshrl.u32 %v1391, 7
        %v1393 = vsub.s32 %v1390, %v1392
        %v1394 = vrot.slane %v1386, %v1393
        %v1396 = vunpack.c.l.s4 1983009808
        %v1397 = vunpack.c.0.s8 %v1396
        %v1398 = vlaneseq
        %v1399 = vshrl.u32 %v1398, 7
        %v1400 = vsub.s32 %v1397, %v1399
        %v1401 = vrot.slane %v1387, %v1400
        %v1402 = vcombine.low %v1378, %v1394
        %v1403 = vcombine.high %v1378, %v1394
        %v1405 = vunpack.c.l.s4 1934713408
        %v1406 = vunpack.c.0.s8 %v1405
        %v1407 = vlaneseq
        %v1408 = vshrl.u32 %v1407, 7
        %v1409 = vsub.s32 %v1406, %v1408
        %v1410 = vrot.slane %v1402, %v1409
        %v1412 = vunpack.c.l.s4 1934713408
        %v1413 = vunpack.c.0.s8 %v1412
        %v1414 = vlaneseq
        %v1415 = vshrl.u32 %v1414, 7
        %v1416 = vsub.s32 %v1413, %v1415
        %v1417 = vrot.slane %v1403, %v1416
        %v1418 = vcombine.low %v1385, %v1401
        %v1419 = vcombine.high %v1385, %v1401
        %v1421 = vunpack.c.l.s4 1934713408
        %v1422 = vunpack.c.0.s8 %v1421
        %v1423 = vlaneseq
        %v1424 = vshrl.u32 %v1423, 7
        %v1425 = vsub.s32 %v1422, %v1424
        %v1426 = vrot.slane %v1418, %v1425
        %v1428 = vunpack.c.l.s4 1934713408
        %v1429 = vunpack.c.0.s8 %v1428
        %v1430 = vlaneseq
        %v1431 = vshrl.u32 %v1430, 7
        %v1432 = vsub.s32 %v1429, %v1431
        %v1433 = vrot.slane %v1419, %v1432
        %v1434 = vcombine.high %v1410, 0.0
        %v1435 = vcombine.high %v1417, 0.0
        %v1436 = vcombine.high %v1426, 0.0
        %v1437 = vcombine.high %v1433, 0.0
        %v1438 = vcombine.low %v1349, %v1357
        %v1439 = vcombine.high %v1349, %v1357
        %v1441 = vunpack.c.l.s4 1983009808
        %v1442 = vunpack.c.0.s8 %v1441
        %v1443 = vlaneseq
        %v1444 = vshrl.u32 %v1443, 7
        %v1445 = vsub.s32 %v1442, %v1444
        %v1446 = vrot.slane %v1438, %v1445
        %v1448 = vunpack.c.l.s4 1983009808
        %v1449 = vunpack.c.0.s8 %v1448
        %v1450 = vlaneseq
        %v1451 = vshrl.u32 %v1450, 7
        %v1452 = vsub.s32 %v1449, %v1451
        %v1453 = vrot.slane %v1439, %v1452
        %v1454 = vcombine.low %v1353, %v1361
        %v1455 = vcombine.high %v1353, %v1361
        %v1457 = vunpack.c.l.s4 1983009808
        %v1458 = vunpack.c.0.s8 %v1457
        %v1459 = vlaneseq
        %v1460 = vshrl.u32 %v1459, 7
        %v1461 = vsub.s32 %v1458, %v1460
        %v1462 = vrot.slane %v1454, %v1461
        %v1464 = vunpack.c.l.s4 1983009808
        %v1465 = vunpack.c.0.s8 %v1464
        %v1466 = vlaneseq
        %v1467 = vshrl.u32 %v1466, 7
        %v1468 = vsub.s32 %v1465, %v1467
        %v1469 = vrot.slane %v1455, %v1468
        %v1470 = vcombine.low %v1446, %v1462
        %v1471 = vcombine.high %v1446, %v1462
        %v1473 = vunpack.c.l.s4 1934713408
        %v1474 = vunpack.c.0.s8 %v1473
        %v1475 = vlaneseq
        %v1476 = vshrl.u32 %v1475, 7
        %v1477 = vsub.s32 %v1474, %v1476
        %v1478 = vrot.slane %v1470, %v1477
        %v1480 = vunpack.c.l.s4 1934713408
        %v1481 = vunpack.c.0.s8 %v1480
        %v1482 = vlaneseq
        %v1483 = vshrl.u32 %v1482, 7
        %v1484 = vsub.s32 %v1481, %v1483
        %v1485 = vrot.slane %v1471, %v1484
        %v1486 = vcombine.low %v1453, %v1469
        %v1487 = vcombine.high %v1453, %v1469
        %v1489 = vunpack.c.l.s4 1934713408
        %v1490 = vunpack.c.0.s8 %v1489
        %v1491 = vlaneseq
        %v1492 = vshrl.u32 %v1491, 7
        %v1493 = vsub.s32 %v1490, %v1492
        %v1494 = vrot.slane %v1486, %v1493
        %v1496 = vunpack.c.l.s4 1934713408
        %v1497 = vunpack.c.0.s8 %v1496
        %v1498 = vlaneseq
        %v1499 = vshrl.u32 %v1498, 7
        %v1500 = vsub.s32 %v1497, %v1499
        %v1501 = vrot.slane %v1487, %v1500
        %v1502 = vcombine.high %v1478, 0.0
        %v1503 = vcombine.high %v1485, 0.0
        %v1504 = vcombine.high %v1494, 0.0
        %v1505 = vcombine.high %v1501, 0.0
        %1507 = vrot.lane.b32.xlu0 %v1434, 16
        %v1508 = vpop.permute.xlu0 %1507
        %1511 = vrot.lane.b32.xlu0 %v1417, 32
        %v1512 = vpop.permute.xlu0 %1511
        %1515 = vrot.lane.b32.xlu0 %v1435, 48
        %v1516 = vpop.permute.xlu0 %1515
        %1519 = vrot.lane.b32.xlu0 %v1426, 64
        %v1520 = vpop.permute.xlu0 %1519
        %1523 = vrot.lane.b32.xlu0 %v1436, 80
        %v1524 = vpop.permute.xlu0 %1523
        %1527 = vrot.lane.b32.xlu0 %v1433, 96
        %v1528 = vpop.permute.xlu0 %1527
        %1531 = vrot.lane.b32.xlu0 %v1437, 112
        %v1532 = vpop.permute.xlu0 %1531
        %1535 = vrot.lane.b32.xlu0 %v1502, 16
        %v1536 = vpop.permute.xlu0 %1535
        %1539 = vrot.lane.b32.xlu0 %v1485, 32
        %v1540 = vpop.permute.xlu0 %1539
        %1543 = vrot.lane.b32.xlu0 %v1503, 48
        %v1544 = vpop.permute.xlu0 %1543
        %1547 = vrot.lane.b32.xlu0 %v1494, 64
        %v1548 = vpop.permute.xlu0 %1547
        %1551 = vrot.lane.b32.xlu0 %v1504, 80
        %v1552 = vpop.permute.xlu0 %1551
        %1555 = vrot.lane.b32.xlu0 %v1501, 96
        %v1556 = vpop.permute.xlu0 %1555
        %1559 = vrot.lane.b32.xlu0 %v1505, 112
        %v1560 = vpop.permute.xlu0 %1559
        %v1562 = vsel %vm388, %v1410, %v1508
        %v1563 = vsel %vm390, %v1562, %v1512
        %v1564 = vsel %vm392, %v1563, %v1516
        %v1565 = vsel %vm394, %v1564, %v1520
        %v1566 = vsel %vm396, %v1565, %v1524
        %v1567 = vsel %vm398, %v1566, %v1528
        %v1568 = vsel %vm400, %v1567, %v1532
        %v1569 = vsel %vm388, %v1478, %v1536
        %v1570 = vsel %vm390, %v1569, %v1540
        %v1571 = vsel %vm392, %v1570, %v1544
        %v1572 = vsel %vm394, %v1571, %v1548
        %v1573 = vsel %vm396, %v1572, %v1552
        %v1574 = vsel %vm398, %v1573, %v1556
        %v1575 = vsel %vm400, %v1574, %v1560
        %vm1576 = vcmask 1045504
        %v1577 = vrot.slane %v184, 2
        %v1578 = vrot.slane %v185, 2
        %v1579 = vsel %vm1576, %v1577, %v1578
        %v1580 = vrot.slane %v186, 2
        %v1581 = vsel %vm1576, %v1578, %v1580
        %v1582 = vrot.slane %v187, 2
        %v1583 = vrot.slane %v188, 2
        %v1584 = vsel %vm1576, %v1582, %v1583
        %v1585 = vrot.slane %v189, 2
        %v1586 = vsel %vm1576, %v1583, %v1585
        %v1587 = vrot.slane %v190, 2
        %v1588 = vrot.slane %v191, 2
        %v1589 = vsel %vm1576, %v1587, %v1588
        %v1590 = vrot.slane %v192, 2
        %v1591 = vsel %vm1576, %v1588, %v1590
        %v1592 = vrot.slane %v193, 2
        %v1593 = vrot.slane %v194, 2
        %v1594 = vsel %vm1576, %v1592, %v1593
        %v1595 = vrot.slane %v195, 2
        %v1596 = vsel %vm1576, %v1593, %v1595
        %v1605 = vcombine.low %v1579, %v1589
        %v1606 = vcombine.high %v1579, %v1589
        %v1608 = vunpack.c.l.s4 1983009808
        %v1609 = vunpack.c.0.s8 %v1608
        %v1610 = vlaneseq
        %v1611 = vshrl.u32 %v1610, 7
        %v1612 = vsub.s32 %v1609, %v1611
        %v1613 = vrot.slane %v1605, %v1612
        %v1615 = vunpack.c.l.s4 1983009808
        %v1616 = vunpack.c.0.s8 %v1615
        %v1617 = vlaneseq
        %v1618 = vshrl.u32 %v1617, 7
        %v1619 = vsub.s32 %v1616, %v1618
        %v1620 = vrot.slane %v1606, %v1619
        %v1621 = vcombine.low %v1584, %v1594
        %v1622 = vcombine.high %v1584, %v1594
        %v1624 = vunpack.c.l.s4 1983009808
        %v1625 = vunpack.c.0.s8 %v1624
        %v1626 = vlaneseq
        %v1627 = vshrl.u32 %v1626, 7
        %v1628 = vsub.s32 %v1625, %v1627
        %v1629 = vrot.slane %v1621, %v1628
        %v1631 = vunpack.c.l.s4 1983009808
        %v1632 = vunpack.c.0.s8 %v1631
        %v1633 = vlaneseq
        %v1634 = vshrl.u32 %v1633, 7
        %v1635 = vsub.s32 %v1632, %v1634
        %v1636 = vrot.slane %v1622, %v1635
        %v1637 = vcombine.low %v1613, %v1629
        %v1638 = vcombine.high %v1613, %v1629
        %v1640 = vunpack.c.l.s4 1934713408
        %v1641 = vunpack.c.0.s8 %v1640
        %v1642 = vlaneseq
        %v1643 = vshrl.u32 %v1642, 7
        %v1644 = vsub.s32 %v1641, %v1643
        %v1645 = vrot.slane %v1637, %v1644
        %v1647 = vunpack.c.l.s4 1934713408
        %v1648 = vunpack.c.0.s8 %v1647
        %v1649 = vlaneseq
        %v1650 = vshrl.u32 %v1649, 7
        %v1651 = vsub.s32 %v1648, %v1650
        %v1652 = vrot.slane %v1638, %v1651
        %v1653 = vcombine.low %v1620, %v1636
        %v1654 = vcombine.high %v1620, %v1636
        %v1656 = vunpack.c.l.s4 1934713408
        %v1657 = vunpack.c.0.s8 %v1656
        %v1658 = vlaneseq
        %v1659 = vshrl.u32 %v1658, 7
        %v1660 = vsub.s32 %v1657, %v1659
        %v1661 = vrot.slane %v1653, %v1660
        %v1663 = vunpack.c.l.s4 1934713408
        %v1664 = vunpack.c.0.s8 %v1663
        %v1665 = vlaneseq
        %v1666 = vshrl.u32 %v1665, 7
        %v1667 = vsub.s32 %v1664, %v1666
        %v1668 = vrot.slane %v1654, %v1667
        %v1669 = vcombine.high %v1645, 0.0
        %v1670 = vcombine.high %v1652, 0.0
        %v1671 = vcombine.high %v1661, 0.0
        %v1672 = vcombine.high %v1668, 0.0
        %v1673 = vcombine.low %v1581, %v1591
        %v1674 = vcombine.high %v1581, %v1591
        %v1676 = vunpack.c.l.s4 1983009808
        %v1677 = vunpack.c.0.s8 %v1676
        %v1678 = vlaneseq
        %v1679 = vshrl.u32 %v1678, 7
        %v1680 = vsub.s32 %v1677, %v1679
        %v1681 = vrot.slane %v1673, %v1680
        %v1683 = vunpack.c.l.s4 1983009808
        %v1684 = vunpack.c.0.s8 %v1683
        %v1685 = vlaneseq
        %v1686 = vshrl.u32 %v1685, 7
        %v1687 = vsub.s32 %v1684, %v1686
        %v1688 = vrot.slane %v1674, %v1687
        %v1689 = vcombine.low %v1586, %v1596
        %v1690 = vcombine.high %v1586, %v1596
        %v1692 = vunpack.c.l.s4 1983009808
        %v1693 = vunpack.c.0.s8 %v1692
        %v1694 = vlaneseq
        %v1695 = vshrl.u32 %v1694, 7
        %v1696 = vsub.s32 %v1693, %v1695
        %v1697 = vrot.slane %v1689, %v1696
        %v1699 = vunpack.c.l.s4 1983009808
        %v1700 = vunpack.c.0.s8 %v1699
        %v1701 = vlaneseq
        %v1702 = vshrl.u32 %v1701, 7
        %v1703 = vsub.s32 %v1700, %v1702
        %v1704 = vrot.slane %v1690, %v1703
        %v1705 = vcombine.low %v1681, %v1697
        %v1706 = vcombine.high %v1681, %v1697
        %v1708 = vunpack.c.l.s4 1934713408
        %v1709 = vunpack.c.0.s8 %v1708
        %v1710 = vlaneseq
        %v1711 = vshrl.u32 %v1710, 7
        %v1712 = vsub.s32 %v1709, %v1711
        %v1713 = vrot.slane %v1705, %v1712
        %v1715 = vunpack.c.l.s4 1934713408
        %v1716 = vunpack.c.0.s8 %v1715
        %v1717 = vlaneseq
        %v1718 = vshrl.u32 %v1717, 7
        %v1719 = vsub.s32 %v1716, %v1718
        %v1720 = vrot.slane %v1706, %v1719
        %v1721 = vcombine.low %v1688, %v1704
        %v1722 = vcombine.high %v1688, %v1704
        %v1724 = vunpack.c.l.s4 1934713408
        %v1725 = vunpack.c.0.s8 %v1724
        %v1726 = vlaneseq
        %v1727 = vshrl.u32 %v1726, 7
        %v1728 = vsub.s32 %v1725, %v1727
        %v1729 = vrot.slane %v1721, %v1728
        %v1731 = vunpack.c.l.s4 1934713408
        %v1732 = vunpack.c.0.s8 %v1731
        %v1733 = vlaneseq
        %v1734 = vshrl.u32 %v1733, 7
        %v1735 = vsub.s32 %v1732, %v1734
        %v1736 = vrot.slane %v1722, %v1735
        %v1737 = vcombine.high %v1713, 0.0
        %v1738 = vcombine.high %v1720, 0.0
        %v1739 = vcombine.high %v1729, 0.0
        %v1740 = vcombine.high %v1736, 0.0
        %1742 = vrot.lane.b32.xlu0 %v1669, 16
        %v1743 = vpop.permute.xlu0 %1742
        %1746 = vrot.lane.b32.xlu0 %v1652, 32
        %v1747 = vpop.permute.xlu0 %1746
        %1750 = vrot.lane.b32.xlu0 %v1670, 48
        %v1751 = vpop.permute.xlu0 %1750
        %1754 = vrot.lane.b32.xlu0 %v1661, 64
        %v1755 = vpop.permute.xlu0 %1754
        %1758 = vrot.lane.b32.xlu0 %v1671, 80
        %v1759 = vpop.permute.xlu0 %1758
        %1762 = vrot.lane.b32.xlu0 %v1668, 96
        %v1763 = vpop.permute.xlu0 %1762
        %1766 = vrot.lane.b32.xlu0 %v1672, 112
        %v1767 = vpop.permute.xlu0 %1766
        %1770 = vrot.lane.b32.xlu0 %v1737, 16
        %v1771 = vpop.permute.xlu0 %1770
        %1774 = vrot.lane.b32.xlu0 %v1720, 32
        %v1775 = vpop.permute.xlu0 %1774
        %1778 = vrot.lane.b32.xlu0 %v1738, 48
        %v1779 = vpop.permute.xlu0 %1778
        %1782 = vrot.lane.b32.xlu0 %v1729, 64
        %v1783 = vpop.permute.xlu0 %1782
        %1786 = vrot.lane.b32.xlu0 %v1739, 80
        %v1787 = vpop.permute.xlu0 %1786
        %1790 = vrot.lane.b32.xlu0 %v1736, 96
        %v1791 = vpop.permute.xlu0 %1790
        %1794 = vrot.lane.b32.xlu0 %v1740, 112
        %v1795 = vpop.permute.xlu0 %1794
        %v1797 = vsel %vm388, %v1645, %v1743
        %v1798 = vsel %vm390, %v1797, %v1747
        %v1799 = vsel %vm392, %v1798, %v1751
        %v1800 = vsel %vm394, %v1799, %v1755
        %v1801 = vsel %vm396, %v1800, %v1759
        %v1802 = vsel %vm398, %v1801, %v1763
        %v1803 = vsel %vm400, %v1802, %v1767
        %v1804 = vsel %vm388, %v1713, %v1771
        %v1805 = vsel %vm390, %v1804, %v1775
        %v1806 = vsel %vm392, %v1805, %v1779
        %v1807 = vsel %vm394, %v1806, %v1783
        %v1808 = vsel %vm396, %v1807, %v1787
        %v1809 = vsel %vm398, %v1808, %v1791
        %v1810 = vsel %vm400, %v1809, %v1795
        %1811 = vrot.lane.b32.xlu0 %v1579, 127
        %v1812 = vpop.permute.xlu0 %1811
        %1813 = vrot.lane.b32.xlu0 %v1581, 127
        %v1814 = vpop.permute.xlu0 %1813
        %1815 = vrot.lane.b32.xlu0 %v1584, 127
        %v1816 = vpop.permute.xlu0 %1815
        %1817 = vrot.lane.b32.xlu0 %v1586, 127
        %v1818 = vpop.permute.xlu0 %1817
        %1819 = vrot.lane.b32.xlu0 %v1589, 127
        %v1820 = vpop.permute.xlu0 %1819
        %1821 = vrot.lane.b32.xlu0 %v1591, 127
        %v1822 = vpop.permute.xlu0 %1821
        %1823 = vrot.lane.b32.xlu0 %v1594, 127
        %v1824 = vpop.permute.xlu0 %1823
        %1825 = vrot.lane.b32.xlu0 %v1596, 127
        %v1826 = vpop.permute.xlu0 %1825
        %v1835 = vcombine.low %v1812, %v1820
        %v1836 = vcombine.high %v1812, %v1820
        %v1838 = vunpack.c.l.s4 1983009808
        %v1839 = vunpack.c.0.s8 %v1838
        %v1840 = vlaneseq
        %v1841 = vshrl.u32 %v1840, 7
        %v1842 = vsub.s32 %v1839, %v1841
        %v1843 = vrot.slane %v1835, %v1842
        %v1845 = vunpack.c.l.s4 1983009808
        %v1846 = vunpack.c.0.s8 %v1845
        %v1847 = vlaneseq
        %v1848 = vshrl.u32 %v1847, 7
        %v1849 = vsub.s32 %v1846, %v1848
        %v1850 = vrot.slane %v1836, %v1849
        %v1851 = vcombine.low %v1816, %v1824
        %v1852 = vcombine.high %v1816, %v1824
        %v1854 = vunpack.c.l.s4 1983009808
        %v1855 = vunpack.c.0.s8 %v1854
        %v1856 = vlaneseq
        %v1857 = vshrl.u32 %v1856, 7
        %v1858 = vsub.s32 %v1855, %v1857
        %v1859 = vrot.slane %v1851, %v1858
        %v1861 = vunpack.c.l.s4 1983009808
        %v1862 = vunpack.c.0.s8 %v1861
        %v1863 = vlaneseq
        %v1864 = vshrl.u32 %v1863, 7
        %v1865 = vsub.s32 %v1862, %v1864
        %v1866 = vrot.slane %v1852, %v1865
        %v1867 = vcombine.low %v1843, %v1859
        %v1868 = vcombine.high %v1843, %v1859
        %v1870 = vunpack.c.l.s4 1934713408
        %v1871 = vunpack.c.0.s8 %v1870
        %v1872 = vlaneseq
        %v1873 = vshrl.u32 %v1872, 7
        %v1874 = vsub.s32 %v1871, %v1873
        %v1875 = vrot.slane %v1867, %v1874
        %v1877 = vunpack.c.l.s4 1934713408
        %v1878 = vunpack.c.0.s8 %v1877
        %v1879 = vlaneseq
        %v1880 = vshrl.u32 %v1879, 7
        %v1881 = vsub.s32 %v1878, %v1880
        %v1882 = vrot.slane %v1868, %v1881
        %v1883 = vcombine.low %v1850, %v1866
        %v1884 = vcombine.high %v1850, %v1866
        %v1886 = vunpack.c.l.s4 1934713408
        %v1887 = vunpack.c.0.s8 %v1886
        %v1888 = vlaneseq
        %v1889 = vshrl.u32 %v1888, 7
        %v1890 = vsub.s32 %v1887, %v1889
        %v1891 = vrot.slane %v1883, %v1890
        %v1893 = vunpack.c.l.s4 1934713408
        %v1894 = vunpack.c.0.s8 %v1893
        %v1895 = vlaneseq
        %v1896 = vshrl.u32 %v1895, 7
        %v1897 = vsub.s32 %v1894, %v1896
        %v1898 = vrot.slane %v1884, %v1897
        %v1899 = vcombine.high %v1875, 0.0
        %v1900 = vcombine.high %v1882, 0.0
        %v1901 = vcombine.high %v1891, 0.0
        %v1902 = vcombine.high %v1898, 0.0
        %v1903 = vcombine.low %v1814, %v1822
        %v1904 = vcombine.high %v1814, %v1822
        %v1906 = vunpack.c.l.s4 1983009808
        %v1907 = vunpack.c.0.s8 %v1906
        %v1908 = vlaneseq
        %v1909 = vshrl.u32 %v1908, 7
        %v1910 = vsub.s32 %v1907, %v1909
        %v1911 = vrot.slane %v1903, %v1910
        %v1913 = vunpack.c.l.s4 1983009808
        %v1914 = vunpack.c.0.s8 %v1913
        %v1915 = vlaneseq
        %v1916 = vshrl.u32 %v1915, 7
        %v1917 = vsub.s32 %v1914, %v1916
        %v1918 = vrot.slane %v1904, %v1917
        %v1919 = vcombine.low %v1818, %v1826
        %v1920 = vcombine.high %v1818, %v1826
        %v1922 = vunpack.c.l.s4 1983009808
        %v1923 = vunpack.c.0.s8 %v1922
        %v1924 = vlaneseq
        %v1925 = vshrl.u32 %v1924, 7
        %v1926 = vsub.s32 %v1923, %v1925
        %v1927 = vrot.slane %v1919, %v1926
        %v1929 = vunpack.c.l.s4 1983009808
        %v1930 = vunpack.c.0.s8 %v1929
        %v1931 = vlaneseq
        %v1932 = vshrl.u32 %v1931, 7
        %v1933 = vsub.s32 %v1930, %v1932
        %v1934 = vrot.slane %v1920, %v1933
        %v1935 = vcombine.low %v1911, %v1927
        %v1936 = vcombine.high %v1911, %v1927
        %v1938 = vunpack.c.l.s4 1934713408
        %v1939 = vunpack.c.0.s8 %v1938
        %v1940 = vlaneseq
        %v1941 = vshrl.u32 %v1940, 7
        %v1942 = vsub.s32 %v1939, %v1941
        %v1943 = vrot.slane %v1935, %v1942
        %v1945 = vunpack.c.l.s4 1934713408
        %v1946 = vunpack.c.0.s8 %v1945
        %v1947 = vlaneseq
        %v1948 = vshrl.u32 %v1947, 7
        %v1949 = vsub.s32 %v1946, %v1948
        %v1950 = vrot.slane %v1936, %v1949
        %v1951 = vcombine.low %v1918, %v1934
        %v1952 = vcombine.high %v1918, %v1934
        %v1954 = vunpack.c.l.s4 1934713408
        %v1955 = vunpack.c.0.s8 %v1954
        %v1956 = vlaneseq
        %v1957 = vshrl.u32 %v1956, 7
        %v1958 = vsub.s32 %v1955, %v1957
        %v1959 = vrot.slane %v1951, %v1958
        %v1961 = vunpack.c.l.s4 1934713408
        %v1962 = vunpack.c.0.s8 %v1961
        %v1963 = vlaneseq
        %v1964 = vshrl.u32 %v1963, 7
        %v1965 = vsub.s32 %v1962, %v1964
        %v1966 = vrot.slane %v1952, %v1965
        %v1967 = vcombine.high %v1943, 0.0
        %v1968 = vcombine.high %v1950, 0.0
        %v1969 = vcombine.high %v1959, 0.0
        %v1970 = vcombine.high %v1966, 0.0
        %1972 = vrot.lane.b32.xlu0 %v1899, 16
        %v1973 = vpop.permute.xlu0 %1972
        %1976 = vrot.lane.b32.xlu0 %v1882, 32
        %v1977 = vpop.permute.xlu0 %1976
        %1980 = vrot.lane.b32.xlu0 %v1900, 48
        %v1981 = vpop.permute.xlu0 %1980
        %1984 = vrot.lane.b32.xlu0 %v1891, 64
        %v1985 = vpop.permute.xlu0 %1984
        %1988 = vrot.lane.b32.xlu0 %v1901, 80
        %v1989 = vpop.permute.xlu0 %1988
        %1992 = vrot.lane.b32.xlu0 %v1898, 96
        %v1993 = vpop.permute.xlu0 %1992
        %1996 = vrot.lane.b32.xlu0 %v1902, 112
        %v1997 = vpop.permute.xlu0 %1996
        %2000 = vrot.lane.b32.xlu0 %v1967, 16
        %v2001 = vpop.permute.xlu0 %2000
        %2004 = vrot.lane.b32.xlu0 %v1950, 32
        %v2005 = vpop.permute.xlu0 %2004
        %2008 = vrot.lane.b32.xlu0 %v1968, 48
        %v2009 = vpop.permute.xlu0 %2008
        %2012 = vrot.lane.b32.xlu0 %v1959, 64
        %v2013 = vpop.permute.xlu0 %2012
        %2016 = vrot.lane.b32.xlu0 %v1969, 80
        %v2017 = vpop.permute.xlu0 %2016
        %2020 = vrot.lane.b32.xlu0 %v1966, 96
        %v2021 = vpop.permute.xlu0 %2020
        %2024 = vrot.lane.b32.xlu0 %v1970, 112
        %v2025 = vpop.permute.xlu0 %2024
        %v2027 = vsel %vm388, %v1875, %v1973
        %v2028 = vsel %vm390, %v2027, %v1977
        %v2029 = vsel %vm392, %v2028, %v1981
        %v2030 = vsel %vm394, %v2029, %v1985
        %v2031 = vsel %vm396, %v2030, %v1989
        %v2032 = vsel %vm398, %v2031, %v1993
        %v2033 = vsel %vm400, %v2032, %v1997
        %v2034 = vsel %vm388, %v1943, %v2001
        %v2035 = vsel %vm390, %v2034, %v2005
        %v2036 = vsel %vm392, %v2035, %v2009
        %v2037 = vsel %vm394, %v2036, %v2013
        %v2038 = vsel %vm396, %v2037, %v2017
        %v2039 = vsel %vm398, %v2038, %v2021
        %v2040 = vsel %vm400, %v2039, %v2025
        %2041 = vrot.lane.b32.xlu0 %v1579, 126
        %v2042 = vpop.permute.xlu0 %2041
        %2043 = vrot.lane.b32.xlu0 %v1581, 126
        %v2044 = vpop.permute.xlu0 %2043
        %2045 = vrot.lane.b32.xlu0 %v1584, 126
        %v2046 = vpop.permute.xlu0 %2045
        %2047 = vrot.lane.b32.xlu0 %v1586, 126
        %v2048 = vpop.permute.xlu0 %2047
        %2049 = vrot.lane.b32.xlu0 %v1589, 126
        %v2050 = vpop.permute.xlu0 %2049
        %2051 = vrot.lane.b32.xlu0 %v1591, 126
        %v2052 = vpop.permute.xlu0 %2051
        %2053 = vrot.lane.b32.xlu0 %v1594, 126
        %v2054 = vpop.permute.xlu0 %2053
        %2055 = vrot.lane.b32.xlu0 %v1596, 126
        %v2056 = vpop.permute.xlu0 %2055
        %v2065 = vcombine.low %v2042, %v2050
        %v2066 = vcombine.high %v2042, %v2050
        %v2068 = vunpack.c.l.s4 1983009808
        %v2069 = vunpack.c.0.s8 %v2068
        %v2070 = vlaneseq
        %v2071 = vshrl.u32 %v2070, 7
        %v2072 = vsub.s32 %v2069, %v2071
        %v2073 = vrot.slane %v2065, %v2072
        %v2075 = vunpack.c.l.s4 1983009808
        %v2076 = vunpack.c.0.s8 %v2075
        %v2077 = vlaneseq
        %v2078 = vshrl.u32 %v2077, 7
        %v2079 = vsub.s32 %v2076, %v2078
        %v2080 = vrot.slane %v2066, %v2079
        %v2081 = vcombine.low %v2046, %v2054
        %v2082 = vcombine.high %v2046, %v2054
        %v2084 = vunpack.c.l.s4 1983009808
        %v2085 = vunpack.c.0.s8 %v2084
        %v2086 = vlaneseq
        %v2087 = vshrl.u32 %v2086, 7
        %v2088 = vsub.s32 %v2085, %v2087
        %v2089 = vrot.slane %v2081, %v2088
        %v2091 = vunpack.c.l.s4 1983009808
        %v2092 = vunpack.c.0.s8 %v2091
        %v2093 = vlaneseq
        %v2094 = vshrl.u32 %v2093, 7
        %v2095 = vsub.s32 %v2092, %v2094
        %v2096 = vrot.slane %v2082, %v2095
        %v2097 = vcombine.low %v2073, %v2089
        %v2098 = vcombine.high %v2073, %v2089
        %v2100 = vunpack.c.l.s4 1934713408
        %v2101 = vunpack.c.0.s8 %v2100
        %v2102 = vlaneseq
        %v2103 = vshrl.u32 %v2102, 7
        %v2104 = vsub.s32 %v2101, %v2103
        %v2105 = vrot.slane %v2097, %v2104
        %v2107 = vunpack.c.l.s4 1934713408
        %v2108 = vunpack.c.0.s8 %v2107
        %v2109 = vlaneseq
        %v2110 = vshrl.u32 %v2109, 7
        %v2111 = vsub.s32 %v2108, %v2110
        %v2112 = vrot.slane %v2098, %v2111
        %v2113 = vcombine.low %v2080, %v2096
        %v2114 = vcombine.high %v2080, %v2096
        %v2116 = vunpack.c.l.s4 1934713408
        %v2117 = vunpack.c.0.s8 %v2116
        %v2118 = vlaneseq
        %v2119 = vshrl.u32 %v2118, 7
        %v2120 = vsub.s32 %v2117, %v2119
        %v2121 = vrot.slane %v2113, %v2120
        %v2123 = vunpack.c.l.s4 1934713408
        %v2124 = vunpack.c.0.s8 %v2123
        %v2125 = vlaneseq
        %v2126 = vshrl.u32 %v2125, 7
        %v2127 = vsub.s32 %v2124, %v2126
        %v2128 = vrot.slane %v2114, %v2127
        %v2129 = vcombine.high %v2105, 0.0
        %v2130 = vcombine.high %v2112, 0.0
        %v2131 = vcombine.high %v2121, 0.0
        %v2132 = vcombine.high %v2128, 0.0
        %v2133 = vcombine.low %v2044, %v2052
        %v2134 = vcombine.high %v2044, %v2052
        %v2136 = vunpack.c.l.s4 1983009808
        %v2137 = vunpack.c.0.s8 %v2136
        %v2138 = vlaneseq
        %v2139 = vshrl.u32 %v2138, 7
        %v2140 = vsub.s32 %v2137, %v2139
        %v2141 = vrot.slane %v2133, %v2140
        %v2143 = vunpack.c.l.s4 1983009808
        %v2144 = vunpack.c.0.s8 %v2143
        %v2145 = vlaneseq
        %v2146 = vshrl.u32 %v2145, 7
        %v2147 = vsub.s32 %v2144, %v2146
        %v2148 = vrot.slane %v2134, %v2147
        %v2149 = vcombine.low %v2048, %v2056
        %v2150 = vcombine.high %v2048, %v2056
        %v2152 = vunpack.c.l.s4 1983009808
        %v2153 = vunpack.c.0.s8 %v2152
        %v2154 = vlaneseq
        %v2155 = vshrl.u32 %v2154, 7
        %v2156 = vsub.s32 %v2153, %v2155
        %v2157 = vrot.slane %v2149, %v2156
        %v2159 = vunpack.c.l.s4 1983009808
        %v2160 = vunpack.c.0.s8 %v2159
        %v2161 = vlaneseq
        %v2162 = vshrl.u32 %v2161, 7
        %v2163 = vsub.s32 %v2160, %v2162
        %v2164 = vrot.slane %v2150, %v2163
        %v2165 = vcombine.low %v2141, %v2157
        %v2166 = vcombine.high %v2141, %v2157
        %v2168 = vunpack.c.l.s4 1934713408
        %v2169 = vunpack.c.0.s8 %v2168
        %v2170 = vlaneseq
        %v2171 = vshrl.u32 %v2170, 7
        %v2172 = vsub.s32 %v2169, %v2171
        %v2173 = vrot.slane %v2165, %v2172
        %v2175 = vunpack.c.l.s4 1934713408
        %v2176 = vunpack.c.0.s8 %v2175
        %v2177 = vlaneseq
        %v2178 = vshrl.u32 %v2177, 7
        %v2179 = vsub.s32 %v2176, %v2178
        %v2180 = vrot.slane %v2166, %v2179
        %v2181 = vcombine.low %v2148, %v2164
        %v2182 = vcombine.high %v2148, %v2164
        %v2184 = vunpack.c.l.s4 1934713408
        %v2185 = vunpack.c.0.s8 %v2184
        %v2186 = vlaneseq
        %v2187 = vshrl.u32 %v2186, 7
        %v2188 = vsub.s32 %v2185, %v2187
        %v2189 = vrot.slane %v2181, %v2188
        %v2191 = vunpack.c.l.s4 1934713408
        %v2192 = vunpack.c.0.s8 %v2191
        %v2193 = vlaneseq
        %v2194 = vshrl.u32 %v2193, 7
        %v2195 = vsub.s32 %v2192, %v2194
        %v2196 = vrot.slane %v2182, %v2195
        %v2197 = vcombine.high %v2173, 0.0
        %v2198 = vcombine.high %v2180, 0.0
        %v2199 = vcombine.high %v2189, 0.0
        %v2200 = vcombine.high %v2196, 0.0
        %2202 = vrot.lane.b32.xlu0 %v2129, 16
        %v2203 = vpop.permute.xlu0 %2202
        %2206 = vrot.lane.b32.xlu0 %v2112, 32
        %v2207 = vpop.permute.xlu0 %2206
        %2210 = vrot.lane.b32.xlu0 %v2130, 48
        %v2211 = vpop.permute.xlu0 %2210
        %2214 = vrot.lane.b32.xlu0 %v2121, 64
        %v2215 = vpop.permute.xlu0 %2214
        %2218 = vrot.lane.b32.xlu0 %v2131, 80
        %v2219 = vpop.permute.xlu0 %2218
        %2222 = vrot.lane.b32.xlu0 %v2128, 96
        %v2223 = vpop.permute.xlu0 %2222
        %2226 = vrot.lane.b32.xlu0 %v2132, 112
        %v2227 = vpop.permute.xlu0 %2226
        %2230 = vrot.lane.b32.xlu0 %v2197, 16
        %v2231 = vpop.permute.xlu0 %2230
        %2234 = vrot.lane.b32.xlu0 %v2180, 32
        %v2235 = vpop.permute.xlu0 %2234
        %2238 = vrot.lane.b32.xlu0 %v2198, 48
        %v2239 = vpop.permute.xlu0 %2238
        %2242 = vrot.lane.b32.xlu0 %v2189, 64
        %v2243 = vpop.permute.xlu0 %2242
        %2246 = vrot.lane.b32.xlu0 %v2199, 80
        %v2247 = vpop.permute.xlu0 %2246
        %2250 = vrot.lane.b32.xlu0 %v2196, 96
        %v2251 = vpop.permute.xlu0 %2250
        %2254 = vrot.lane.b32.xlu0 %v2200, 112
        %v2255 = vpop.permute.xlu0 %2254
        %v2257 = vsel %vm388, %v2105, %v2203
        %v2258 = vsel %vm390, %v2257, %v2207
        %v2259 = vsel %vm392, %v2258, %v2211
        %v2260 = vsel %vm394, %v2259, %v2215
        %v2261 = vsel %vm396, %v2260, %v2219
        %v2262 = vsel %vm398, %v2261, %v2223
        %v2263 = vsel %vm400, %v2262, %v2227
        %v2264 = vsel %vm388, %v2173, %v2231
        %v2265 = vsel %vm390, %v2264, %v2235
        %v2266 = vsel %vm392, %v2265, %v2239
        %v2267 = vsel %vm394, %v2266, %v2243
        %v2268 = vsel %vm396, %v2267, %v2247
        %v2269 = vsel %vm398, %v2268, %v2251
        %v2270 = vsel %vm400, %v2269, %v2255
        %v2273 = vrot.slane %v639, 4
        %v2274 = vrot.slane %v646, 4
        %v2279 = vrot.slane %v1108, 4
        %v2280 = vrot.slane %v1115, 4
        %v2285 = vrot.slane %v1568, 4
        %v2286 = vrot.slane %v1575, 4
        %v2291 = vrot.slane %v2033, 4
        %v2292 = vrot.slane %v2040, 4
        %vm2295 = vcmask 1043456
        %v2296 = vsel %vm2295, %v401, %v2273
        %v2297 = vsel %vm2295, %v408, %v2274
        %v2298 = vsel %vm2295, %v869, %v2279
        %v2299 = vsel %vm2295, %v876, %v2280
        %v2300 = vsel %vm2295, %v1338, %v2285
        %v2301 = vsel %vm2295, %v1345, %v2286
        %v2302 = vsel %vm2295, %v1803, %v2291
        %v2303 = vsel %vm2295, %v1810, %v2292
        %v2304 = vld [vmem:[%s1] sm:$0xff]
        %v2305 = vld [vmem:[%s2] sm:$0xff]
        %2307 = vset.pattern.permute.xlu0 0
        %2308 = vperm.xlu0 %2307, %v2305
        %v2309 = vpop.permute.xlu0 %2308
        %vm2311 = vcmask 293888
        %v2313 = vsel %vm2311, %v2304, 0
        %v2316 = vsel %vm2295, %v2263, 0
        %v2319 = vsel %vm2295, %v2270, 0
        %2321 = vmatprep.subr.mxu0 %v2297
        %2322 = vmatpush1.msra.mxu0 %v2296
        %2323 = vmatprep.subr.mxu0 %v2299
        %2324 = vmatpush1.msra.mxu0 %v2298
        %2325 = vmatprep.subr.mxu0 %v2301
        %2326 = vmatpush1.msra.mxu0 %v2300
        %2327 = vmatprep.subr.mxu0 %v2303
        %2328 = vmatpush1.msra.mxu0 %v2302
        %2329 = vmatprep.subr.mxu0 %v2319
        %2330 = vmatpush1.msra.mxu0 %v2316
        %2331 = vmatprep.subr.mxu0 0.0
        %2332 = vmatpush1.msra.mxu0 0.0
        %2333 = vmatprep.subr.mxu0 0.0
        %2334 = vmatpush1.msra.mxu0 0.0
        %2335 = vmatprep.subr.mxu0 0.0
        %2336 = vmatpush1.msra.mxu0 0.0
        %2337 = vmatprep.subr.mxu0 0.0
        %2338 = vmatpush1.msra.mxu0 0.0
        %2339 = vmatprep.subr.mxu0 0.0
        %2340 = vmatpush1.msra.mxu0 0.0
        %2341 = vmatprep.subr.mxu0 0.0
        %2342 = vmatpush1.msra.mxu0 0.0
        %2343 = vmatprep.subr.mxu0 0.0
        %2344 = vmatpush1.msra.mxu0 0.0
        %2345 = vmatprep.subr.mxu0 0.0
        %2346 = vmatpush1.msra.mxu0 0.0
        %2347 = vmatprep.subr.mxu0 0.0
        %2348 = vmatpush1.msra.mxu0 0.0
        %2349 = vmatprep.subr.mxu0 0.0
        %2350 = vmatpush1.msra.mxu0 0.0
        %2351 = vmatprep.subr.mxu0 0.0
        %2352 = vmatpush1.msra.mxu0 0.0
        %2353 = vmatprep.subr.mxu0 0.0
        %2354 = vmatpush1.msra.mxu0 0.0
        %2355 = vmatprep.subr.mxu0 0.0
        %2356 = vmatpush1.msra.mxu0 0.0
        %2357 = vmatprep.subr.mxu0 0.0
        %2358 = vmatpush1.msra.mxu0 0.0
        %2359 = vmatprep.subr.mxu0 0.0
        %2360 = vmatpush1.msra.mxu0 0.0
        %2361 = vmatprep.subr.mxu0 0.0
        %2362 = vmatpush1.msra.mxu0 0.0
        %2363 = vmatprep.subr.mxu0 0.0
        %2364 = vmatpush1.msra.mxu0 0.0
        %2365 = vmatprep.subr.mxu0 0.0
        %2366 = vmatpush1.msra.mxu0 0.0
        %2367 = vmatprep.subr.mxu0 0.0
        %2368 = vmatpush1.msra.mxu0 0.0
        %2369 = vmatprep.subr.mxu0 0.0
        %2370 = vmatpush1.msra.mxu0 0.0
        %2371 = vmatprep.subr.mxu0 0.0
        %2372 = vmatpush1.msra.mxu0 0.0
        %2373 = vmatprep.subr.mxu0 0.0
        %2374 = vmatpush1.msra.mxu0 0.0
        %2375 = vmatprep.subr.mxu0 0.0
        %2376 = vmatpush1.msra.mxu0 0.0
        %2377 = vmatprep.subr.mxu0 0.0
        %2378 = vmatpush1.msra.mxu0 0.0
        %2379 = vmatprep.subr.mxu0 0.0
        %2380 = vmatpush1.msra.mxu0 0.0
        %2381 = vmatprep.subr.mxu0 0.0
        %2382 = vmatpush1.msra.mxu0 0.0
        %2383 = vmatprep.subr.mxu0 0.0
        %2384 = vmatpush1.msra.mxu0 0.0
        %2385 = vmatprep.mubr.f32.mxu0 0.0
        %2386 = vmatmul.mubr.f32.gmra.mrb[0].mxu0 %v2313
        %v2387 = vpop.f32.mrb[0].mxu0
        %v2388 = vadd.f32 %v2309, %v2387
        %v2389 = vpop.f32.mrb[0].mxu0
        %v2390 = vadd.f32 %v2309, %v2389
        %2391 = vdwg.mxu0
        %2392 = vst [vmem:[%s177] sm:$0xff] %v2388
        %2393 = vst [vmem:[%s177 + $0x8] sm:$0xff] %v2390
        %s2394 = sand.u32 %s107, 1
        %s2395 = scalar_lea.sflag [#allocation3], %s2394
        %s2396 = sand.u32 %s107, 1
        %s2397 = smul.addr %s2396, 16
        %s2398 = scalar_lea.vmem [#allocation2], %s2397
        // Predicated region
        $region33: #{tpu_custom_call.1} parent=31 // pred_check
          %p2399 = pneg %p117
        $region34: #{tpu_custom_call.1} parent=31 // pred_check_branch
          %2401 = sbr.rel (%p2399) target = $region36
        $region35: #{tpu_custom_call.1} parent=31 // pred_region
          %s2402 = smul.u32 2, %s22
          %s2404 = ssub.s32 256, 256
          %2405 = vsyncadd %s2395, %s2404
          %s2406 = smul.addr %s21, 2
          %s2407 = sadd.s32 %s2402, %s2406
          %s2408 = smul.addr %s2407, 128
          %s2409 = scalar_lea.hbm %s3, %s2408
          %s2411 = sshll.u32 %s2398, 4
          %s2412 = int_to_ptr.vmem [resolvable:$true] %s2411
          %2414 = dma.vmem_to_hbm [thread:$0]  %s2412, 256, %s2409, %s2395
        $region36: #{tpu_custom_call.1} parent=31 // pred_fallthru
          _
      $region32: #{tpu_custom_call.1} parent=5 // pred_fallthru
        _
      %p2415 = scmp.le.s32.totalorder 2, %s12
      // Predicated region
      $region37: #{tpu_custom_call.1} parent=5 // pred_check
        %p2416 = pneg %p2415
      $region38: #{tpu_custom_call.1} parent=5 // pred_check_branch
        %2418 = sbr.rel (%p2416) target = $region40
      $region39: #{tpu_custom_call.1} parent=5 // pred_region
        %s2419 = ssub.s32 %s12, 2
        // Predicated region
        $region41: #{tpu_custom_call.1} parent=39 // pred_check
          %p2420 = pneg %p123
        $region42: #{tpu_custom_call.1} parent=39 // pred_check_branch
          %2422 = sbr.rel (%p2420) target = $region44
        $region43: #{tpu_custom_call.1} parent=39 // pred_region
          %s2423 = sand.u32 %s108, 1
          %s2424 = scalar_lea.sflag [#allocation3], %s2423
          %s2425 = sand.u32 %s108, 1
          %s2426 = smul.addr %s2425, 16
          %s2427 = scalar_lea.vmem [#allocation2], %s2426
          %2428 = dma.done %s2424, 256
        $region44: #{tpu_custom_call.1} parent=39 // pred_fallthru
          _
      $region40: #{tpu_custom_call.1} parent=5 // pred_fallthru
        _
    $region6: #{tpu_custom_call.1} parent=1 // loop_footer
      %s16 = sadd.s32 1, %s12
    $region7: #{tpu_custom_call.1} parent=1 // loop_footer_branch
      %11 = sbr.rel target = $region3
    $region8: #{tpu_custom_call.1} parent=1 // loop_exit
      _
    %2429 = vsyncpa [#allocation3], 1
    %s2430 = scalar_lea.sflag [#allocation3], 1
    %2431 = vsyncpa %s2430, 1

</llo_original>
